<compile_context>
chip_gen: v7x
topology: tpu7x:2x2x1
jax: 0.10.0
libtpu: 0.0.40
codegen_flags: <defaults>
</compile_context>

<pallas_src>
import functools

import jax
import jax.numpy as jnp
from jax import lax
from jax.experimental import pallas as pl
from jax.experimental.pallas import tpu as pltpu

NEG_SLOPE = 0.01  # nn.LeakyReLU default


def _double_conv_kernel(x_ref, w1_ref, b1_ref, w2_ref, b2_ref, out_ref,
                        *, row_tile, img_h, neg_slope):
    """One (image, row-tile) per grid step.

    x_ref:   (TH+4, W+2, Cin)   zero/halo-padded input rows (NHWC, compute dtype)
    w1_ref:  (9*Cin, Cmid)      conv1 weights, BN1 scale folded in (im2col layout)
    b1_ref:  (1, Cmid)          folded BN1 bias (f32)
    w2_ref:  (9*Cmid, Cout)     conv2 weights, BN2 scale folded in
    b2_ref:  (1, Cout)          folded BN2 bias (f32)
    out_ref: (TH, W, Cout)      output rows (f32)
    """
    TH = row_tile
    THp = TH + 2                      # conv1 must also produce the conv2 halo rows
    W = x_ref.shape[1] - 2
    Cin = x_ref.shape[2]
    Cmid = w1_ref.shape[1]
    Cout = w2_ref.shape[1]

    t = pl.program_id(1)

    # Upcast once; all slicing / concatenation happens in f32 (robust layouts),
    # the matmul operands are cast back to the compute dtype (bf16) just before the dot.
    x = x_ref[...].astype(jnp.float32)                      # (TH+4, W+2, Cin)

    # ---- conv1 as a single im2col matmul: K = 9*Cin -------------------------
    cols1 = [x[dy:dy + THp, dx:dx + W, :]                   # (THp, W, Cin) each
             for dy in range(3) for dx in range(3)]
    p1 = jnp.concatenate(cols1, axis=-1)                    # (THp, W, 9*Cin)
    p1 = p1.reshape(THp * W, 9 * Cin)
    acc1 = jnp.dot(p1.astype(w1_ref.dtype), w1_ref[...],
                   preferred_element_type=jnp.float32)      # (THp*W, Cmid) f32

    # ---- BN1 bias (scale already folded into w1) + LeakyReLU ----------------
    h1 = acc1 + b1_ref[...]
    h1 = jnp.where(h1 > 0, h1, neg_slope * h1)
    h1 = h1.reshape(THp, W, Cmid)

    # Rows of the conv2 halo that fall on the image boundary are conv2's zero
    # padding -> force them to exactly zero.
    row_img = t * TH - 1 + lax.broadcasted_iota(jnp.int32, (THp, W, Cmid), 0)
    h1 = jnp.where((row_img >= 0) & (row_img < img_h), h1, 0.0)

    # ---- pad W by one zero column on each side (value-level, no scratch) ----
    zc = jnp.zeros((THp, 1, Cmid), jnp.float32)
    h1p = jnp.concatenate([zc, h1, zc], axis=1)             # (THp, W+2, Cmid)

    # ---- conv2 as a single im2col matmul: K = 9*Cmid ------------------------
    cols2 = [h1p[dy:dy + TH, dx:dx + W, :]                  # (TH, W, Cmid) each
             for dy in range(3) for dx in range(3)]
    p2 = jnp.concatenate(cols2, axis=-1)                    # (TH, W, 9*Cmid)
    p2 = p2.reshape(TH * W, 9 * Cmid)
    acc2 = jnp.dot(p2.astype(w2_ref.dtype), w2_ref[...],
                   preferred_element_type=jnp.float32)      # (TH*W, Cout) f32

    # ---- BN2 bias + LeakyReLU; Dropout(p=0) is identity ---------------------
    h2 = acc2 + b2_ref[...]
    h2 = jnp.where(h2 > 0, h2, neg_slope * h2)
    out_ref[...] = h2.reshape(TH, W, Cout).astype(out_ref.dtype)


def _vmem_bytes_estimate(TH, W, Cin, Cmid, Cout, compute_itemsize):
    """Rough upper bound on per-step VMEM (blocks double-buffered + live temporaries)."""
    THp, Wp = TH + 2, W + 2
    blk_in = (TH + 4) * Wp * Cin * compute_itemsize
    blk_out = TH * W * Cout * 4
    weights = (9 * Cin * Cmid + 9 * Cmid * Cout) * compute_itemsize + (Cmid + Cout) * 4
    tmp = 4 * ((TH + 4) * Wp * Cin                 # f32 upcast of the input tile
               + THp * W * 9 * Cin                 # conv1 im2col slab
               + 3 * THp * Wp * Cmid               # h1 / padded h1
               + TH * W * 9 * Cmid                 # conv2 im2col slab
               + 2 * TH * W * Cout)                # acc2 + epilogue
    return 2 * (blk_in + blk_out) + weights + tmp


def double_conv_pallas(x_nchw, params, eps=1e-5,
                       compute_dtype=jnp.bfloat16, row_tile=8):
    """(Conv3x3 -> BN -> LeakyReLU) x2 on NCHW input via a fused Pallas kernel.

    row_tile: rows of output per grid step.  Tune per generation: keep TH*W a
    multiple of 128 (v5e MXU), and use ~half the v6e tile on v7x (64 MiB VMEM/TC).
    """
    (w1_oihw, g1, beta1, rm1, rv1,
     w2_oihw, g2, beta2, rm2, rv2) = params

    N, Cin, H, W = x_nchw.shape
    Cmid = w1_oihw.shape[0]
    Cout = w2_oihw.shape[0]

    TH = max(1, min(int(row_tile), H))
    n_tiles = pl.cdiv(H, TH)
    Hp = n_tiles * TH

    # ---- fold eval-mode BN: scale goes into the weights, bias stays separate ----
    s1 = g1 / jnp.sqrt(rv1 + eps)
    b1 = (beta1 - rm1 * s1).reshape(1, Cmid).astype(jnp.float32)
    s2 = g2 / jnp.sqrt(rv2 + eps)
    b2 = (beta2 - rm2 * s2).reshape(1, Cout).astype(jnp.float32)

    # OIHW -> HWIO, scale per output channel, flatten to im2col layout (9*Cin, Cout).
    w1m = (jnp.transpose(w1_oihw, (2, 3, 1, 0)).astype(jnp.float32) * s1)
    w1m = w1m.reshape(9 * Cin, Cmid).astype(compute_dtype)
    w2m = (jnp.transpose(w2_oihw, (2, 3, 1, 0)).astype(jnp.float32) * s2)
    w2m = w2m.reshape(9 * Cmid, Cout).astype(compute_dtype)

    # NCHW -> NHWC, pad W by 1, pad H by 2 (two convs of halo) + row-tile remainder.
    x_nhwc = jnp.transpose(x_nchw, (0, 2, 3, 1))
    xp = jnp.pad(x_nhwc, ((0, 0), (2, (Hp - H) + 2), (1, 1), (0, 0)))
    xp = xp.astype(compute_dtype)                       # (N, Hp+4, W+2, Cin)

    # Overlapping row tiles with a 2-row halo on each side (glue; ~(TH+4)/TH duplication).
    # TODO(synk): an element-indexed BlockSpec / manual DMA would avoid the halo copy.
    idx = (jnp.arange(n_tiles) * TH)[:, None] + jnp.arange(TH + 4)[None, :]
    xt = xp[:, idx]                                     # (N, n_tiles, TH+4, W+2, Cin)

    compute_itemsize = jnp.dtype(compute_dtype).itemsize
    est = _vmem_bytes_estimate(TH, W, Cin, Cmid, Cout, compute_itemsize)
    vmem_limit = int(min(64 * 2**20, max(32 * 2**20, 2 * est)))

    kernel = functools.partial(_double_conv_kernel,
                               row_tile=TH, img_h=H, neg_slope=NEG_SLOPE)

    out_t = pl.pallas_call(
        kernel,
        out_shape=jax.ShapeDtypeStruct((N, n_tiles, TH, W, Cout), jnp.float32),
        grid_spec=pltpu.PrefetchScalarGridSpec(
            num_scalar_prefetch=0,
            grid=(N, n_tiles),
            in_specs=[
                pl.BlockSpec((None, None, TH + 4, W + 2, Cin),
                             lambda n, t: (n, t, 0, 0, 0)),
                pl.BlockSpec((9 * Cin, Cmid), lambda n, t: (0, 0)),
                pl.BlockSpec((1, Cmid), lambda n, t: (0, 0)),
                pl.BlockSpec((9 * Cmid, Cout), lambda n, t: (0, 0)),
                pl.BlockSpec((1, Cout), lambda n, t: (0, 0)),
            ],
            out_specs=pl.BlockSpec((None, None, TH, W, Cout),
                                   lambda n, t: (n, t, 0, 0, 0)),
        ),
        compiler_params=pltpu.CompilerParams(
            dimension_semantics=("parallel", "parallel"),
            vmem_limit_bytes=vmem_limit),
    )(xt, w1m, b1, w2m, b2)

    out_nhwc = out_t.reshape(N, Hp, W, Cout)[:, :H]
    return jnp.transpose(out_nhwc, (0, 3, 1, 2))        # back to NCHW


def double_conv_reference(x_nchw, params, eps=1e-5):
    """Pure-JAX f32 reference matching the PyTorch forward (eval-mode BN)."""
    (w1, g1, beta1, rm1, rv1, w2, g2, beta2, rm2, rv2) = params

    def conv_bn_lrelu(x, w, g, beta, rm, rv):
        y = lax.conv_general_dilated(
            x, w, window_strides=(1, 1), padding=((1, 1), (1, 1)),
            dimension_numbers=('NCHW', 'OIHW', 'NCHW'))
        scale = (g / jnp.sqrt(rv + eps)).reshape(1, -1, 1, 1)
        bias = (beta - rm * g / jnp.sqrt(rv + eps)).reshape(1, -1, 1, 1)
        y = y * scale + bias
        return jnp.where(y > 0, y, NEG_SLOPE * y)

    h = conv_bn_lrelu(x_nchw, w1, g1, beta1, rm1, rv1)
    return conv_bn_lrelu(h, w2, g2, beta2, rm2, rv2)


def make_params(key, in_channels, mid_channels, out_channels):
    ks = jax.random.split(key, 8)
    w1 = jax.random.normal(ks[0], (mid_channels, in_channels, 3, 3),
                           jnp.float32) * 0.1
    g1 = 1.0 + 0.1 * jax.random.normal(ks[1], (mid_channels,), jnp.float32)
    beta1 = 0.1 * jax.random.normal(ks[2], (mid_channels,), jnp.float32)
    rm1 = 0.05 * jax.random.normal(ks[3], (mid_channels,), jnp.float32)
    rv1 = 1.0 + 0.1 * jax.random.uniform(ks[3], (mid_channels,), jnp.float32)

    w2 = jax.random.normal(ks[4], (out_channels, mid_channels, 3, 3),
                           jnp.float32) * 0.1
    g2 = 1.0 + 0.1 * jax.random.normal(ks[5], (out_channels,), jnp.float32)
    beta2 = 0.1 * jax.random.normal(ks[6], (out_channels,), jnp.float32)
    rm2 = 0.05 * jax.random.normal(ks[7], (out_channels,), jnp.float32)
    rv2 = 1.0 + 0.1 * jax.random.uniform(ks[7], (out_channels,), jnp.float32)
    return (w1, g1, beta1, rm1, rv1, w2, g2, beta2, rm2, rv2)


if __name__ == "__main__":
    key = jax.random.PRNGKey(0)
    k_x, k_p = jax.random.split(key)

    N, Cin, H, W = 2, 4, 16, 16
    Cout = 8
    Cmid = Cout  # mid_channels defaults to out_channels

    x = jax.random.normal(k_x, (N, Cin, H, W), jnp.float32)
    params = make_params(k_p, Cin, Cmid, Cout)

    ref = double_conv_reference(x, params)

    # f32 compute path: must match the reference tightly.
    out_f32 = jax.block_until_ready(
        double_conv_pallas(x, params, compute_dtype=jnp.float32, row_tile=8))
    assert out_f32.shape == (N, Cout, H, W), out_f32.shape
    err_f32 = float(jnp.max(jnp.abs(out_f32 - ref)))
    assert jnp.allclose(out_f32, ref, atol=1e-4, rtol=1e-4), err_f32

    # bf16 compute path (the optimized default): looser tolerance vs the f32 reference.
    out_bf16 = jax.block_until_ready(
        double_conv_pallas(x, params, compute_dtype=jnp.bfloat16, row_tile=8))
    assert out_bf16.shape == (N, Cout, H, W), out_bf16.shape
    err_bf16 = float(jnp.max(jnp.abs(out_bf16 - ref)))
    assert jnp.allclose(out_bf16, ref, atol=3e-2, rtol=3e-2), err_bf16

    print("KERNEL_OK")
</pallas_src>

<mosaic_0001>
module attributes {stable_mosaic.version = 11 : i64} {
  func.func @_double_conv_kernel(%arg0: i32, %arg1: i32, %arg2: memref<1x1x12x18x4xf32, #tpu.memory_space<vmem>>, %arg3: memref<36x8xf32, #tpu.memory_space<vmem>>, %arg4: memref<1x8xf32, #tpu.memory_space<vmem>>, %arg5: memref<72x8xf32, #tpu.memory_space<vmem>>, %arg6: memref<1x8xf32, #tpu.memory_space<vmem>>, %arg7: memref<1x1x8x16x8xf32, #tpu.memory_space<vmem>>) attributes {dimension_semantics = [#tpu.dimension_semantics<parallel>, #tpu.dimension_semantics<parallel>], iteration_bounds = array<i64: 2, 2>, scalar_prefetch = 0 : i64, scratch_operands = 0 : i64, tpu.core_type = #tpu.core_type<tc>, window_params = [{transform_indices = @transform_0, window_bounds = array<i64: 1, 1, 12, 18, 4>}, {pipeline_mode = #tpu.pipeline_mode<synchronous>, transform_indices = @transform_1, window_bounds = array<i64: 36, 8>}, {pipeline_mode = #tpu.pipeline_mode<synchronous>, transform_indices = @transform_2, window_bounds = array<i64: 1, 8>}, {pipeline_mode = #tpu.pipeline_mode<synchronous>, transform_indices = @transform_3, window_bounds = array<i64: 72, 8>}, {pipeline_mode = #tpu.pipeline_mode<synchronous>, transform_indices = @transform_4, window_bounds = array<i64: 1, 8>}, {transform_indices = @transform_5, window_bounds = array<i64: 1, 1, 8, 16, 8>}]} {
    %c0 = arith.constant 0 : index
    %c0_0 = arith.constant 0 : index
    %c0_1 = arith.constant 0 : index
    %c0_2 = arith.constant 0 : index
    %c0_3 = arith.constant 0 : index
    %0 = vector.load %arg2[%c0, %c0_0, %c0_1, %c0_2, %c0_3] : memref<1x1x12x18x4xf32, #tpu.memory_space<vmem>>, vector<1x1x12x18x4xf32>
    %1 = vector.shape_cast %0 : vector<1x1x12x18x4xf32> to vector<12x18x4xf32>
    %2 = vector.extract_strided_slice %1 {offsets = [0, 0, 0], sizes = [10, 16, 4], strides = [1, 1, 1]} : vector<12x18x4xf32> to vector<10x16x4xf32>
    %3 = vector.extract_strided_slice %1 {offsets = [0, 1, 0], sizes = [10, 16, 4], strides = [1, 1, 1]} : vector<12x18x4xf32> to vector<10x16x4xf32>
    %4 = vector.extract_strided_slice %1 {offsets = [0, 2, 0], sizes = [10, 16, 4], strides = [1, 1, 1]} : vector<12x18x4xf32> to vector<10x16x4xf32>
    %5 = vector.extract_strided_slice %1 {offsets = [1, 0, 0], sizes = [10, 16, 4], strides = [1, 1, 1]} : vector<12x18x4xf32> to vector<10x16x4xf32>
    %6 = vector.extract_strided_slice %1 {offsets = [1, 1, 0], sizes = [10, 16, 4], strides = [1, 1, 1]} : vector<12x18x4xf32> to vector<10x16x4xf32>
    %7 = vector.extract_strided_slice %1 {offsets = [1, 2, 0], sizes = [10, 16, 4], strides = [1, 1, 1]} : vector<12x18x4xf32> to vector<10x16x4xf32>
    %8 = vector.extract_strided_slice %1 {offsets = [2, 0, 0], sizes = [10, 16, 4], strides = [1, 1, 1]} : vector<12x18x4xf32> to vector<10x16x4xf32>
    %9 = vector.extract_strided_slice %1 {offsets = [2, 1, 0], sizes = [10, 16, 4], strides = [1, 1, 1]} : vector<12x18x4xf32> to vector<10x16x4xf32>
    %10 = vector.extract_strided_slice %1 {offsets = [2, 2, 0], sizes = [10, 16, 4], strides = [1, 1, 1]} : vector<12x18x4xf32> to vector<10x16x4xf32>
    %11 = tpu.concatenate %2, %3, %4, %5, %6, %7, %8, %9, %10 in 2 : vector<10x16x4xf32>, vector<10x16x4xf32>, vector<10x16x4xf32>, vector<10x16x4xf32>, vector<10x16x4xf32>, vector<10x16x4xf32>, vector<10x16x4xf32>, vector<10x16x4xf32>, vector<10x16x4xf32> -> vector<10x16x36xf32>
    %12 = vector.shape_cast %11 : vector<10x16x36xf32> to vector<160x36xf32>
    %c0_4 = arith.constant 0 : index
    %c0_5 = arith.constant 0 : index
    %13 = vector.load %arg3[%c0_4, %c0_5] : memref<36x8xf32, #tpu.memory_space<vmem>>, vector<36x8xf32>
    %cst = arith.constant dense<0.000000e+00> : vector<160x8xf32>
    %14 = tpu.matmul %12, %13, %cst {dimension_numbers = #tpu.dot_dimension_numbers<[1], [0], [0], [1], [0, 0, 1, 1], [], []>} : vector<160x36xf32>, vector<36x8xf32>, vector<160x8xf32> -> vector<160x8xf32>
    %c0_6 = arith.constant 0 : index
    %c0_7 = arith.constant 0 : index
    %15 = vector.load %arg4[%c0_6, %c0_7] : memref<1x8xf32, #tpu.memory_space<vmem>>, vector<1x8xf32>
    %16 = vector.broadcast %15 : vector<1x8xf32> to vector<160x8xf32>
    %17 = arith.addf %14, %16 : vector<160x8xf32>
    %cst_8 = arith.constant 0.000000e+00 : f32
    %18 = vector.broadcast %cst_8 : f32 to vector<160x8xf32>
    %19 = arith.cmpf ogt, %17, %18 : vector<160x8xf32>
    %cst_9 = arith.constant 0.00999999977 : f32
    %20 = vector.broadcast %cst_9 : f32 to vector<160x8xf32>
    %21 = arith.mulf %20, %17 : vector<160x8xf32>
    %22 = arith.select %19, %17, %21 : vector<160x8xi1>, vector<160x8xf32>
    %23 = vector.shape_cast %22 : vector<160x8xf32> to vector<10x16x8xf32>
    %c8_i32 = arith.constant 8 : i32
    %24 = arith.muli %arg1, %c8_i32 : i32
    %c1_i32 = arith.constant 1 : i32
    %25 = arith.subi %24, %c1_i32 : i32
    %26 = tpu.iota {dimensions = array<i32: 0>} : vector<10x16x8xi32>
    %27 = vector.broadcast %25 : i32 to vector<10x16x8xi32>
    %28 = arith.addi %27, %26 : vector<10x16x8xi32>
    %c0_i32 = arith.constant 0 : i32
    %29 = vector.broadcast %c0_i32 : i32 to vector<10x16x8xi32>
    %30 = arith.cmpi sge, %28, %29 : vector<10x16x8xi32>
    %c16_i32 = arith.constant 16 : i32
    %31 = vector.broadcast %c16_i32 : i32 to vector<10x16x8xi32>
    %32 = arith.cmpi slt, %28, %31 : vector<10x16x8xi32>
    %33 = arith.andi %30, %32 : vector<10x16x8xi1>
    %cst_10 = arith.constant 0.000000e+00 : f32
    %34 = vector.broadcast %cst_10 : f32 to vector<10x16x8xf32>
    %35 = arith.select %33, %23, %34 : vector<10x16x8xi1>, vector<10x16x8xf32>
    %cst_11 = arith.constant 0.000000e+00 : f32
    %36 = vector.broadcast %cst_11 : f32 to vector<10x1x8xf32>
    %37 = tpu.concatenate %36, %35, %36 in 1 : vector<10x1x8xf32>, vector<10x16x8xf32>, vector<10x1x8xf32> -> vector<10x18x8xf32>
    %38 = vector.extract_strided_slice %37 {offsets = [0, 0, 0], sizes = [8, 16, 8], strides = [1, 1, 1]} : vector<10x18x8xf32> to vector<8x16x8xf32>
    %39 = vector.extract_strided_slice %37 {offsets = [0, 1, 0], sizes = [8, 16, 8], strides = [1, 1, 1]} : vector<10x18x8xf32> to vector<8x16x8xf32>
    %40 = vector.extract_strided_slice %37 {offsets = [0, 2, 0], sizes = [8, 16, 8], strides = [1, 1, 1]} : vector<10x18x8xf32> to vector<8x16x8xf32>
    %41 = vector.extract_strided_slice %37 {offsets = [1, 0, 0], sizes = [8, 16, 8], strides = [1, 1, 1]} : vector<10x18x8xf32> to vector<8x16x8xf32>
    %42 = vector.extract_strided_slice %37 {offsets = [1, 1, 0], sizes = [8, 16, 8], strides = [1, 1, 1]} : vector<10x18x8xf32> to vector<8x16x8xf32>
    %43 = vector.extract_strided_slice %37 {offsets = [1, 2, 0], sizes = [8, 16, 8], strides = [1, 1, 1]} : vector<10x18x8xf32> to vector<8x16x8xf32>
    %44 = vector.extract_strided_slice %37 {offsets = [2, 0, 0], sizes = [8, 16, 8], strides = [1, 1, 1]} : vector<10x18x8xf32> to vector<8x16x8xf32>
    %45 = vector.extract_strided_slice %37 {offsets = [2, 1, 0], sizes = [8, 16, 8], strides = [1, 1, 1]} : vector<10x18x8xf32> to vector<8x16x8xf32>
    %46 = vector.extract_strided_slice %37 {offsets = [2, 2, 0], sizes = [8, 16, 8], strides = [1, 1, 1]} : vector<10x18x8xf32> to vector<8x16x8xf32>
    %47 = tpu.concatenate %38, %39, %40, %41, %42, %43, %44, %45, %46 in 2 : vector<8x16x8xf32>, vector<8x16x8xf32>, vector<8x16x8xf32>, vector<8x16x8xf32>, vector<8x16x8xf32>, vector<8x16x8xf32>, vector<8x16x8xf32>, vector<8x16x8xf32>, vector<8x16x8xf32> -> vector<8x16x72xf32>
    %48 = vector.shape_cast %47 : vector<8x16x72xf32> to vector<128x72xf32>
    %c0_12 = arith.constant 0 : index
    %c0_13 = arith.constant 0 : index
    %49 = vector.load %arg5[%c0_12, %c0_13] : memref<72x8xf32, #tpu.memory_space<vmem>>, vector<72x8xf32>
    %cst_14 = arith.constant dense<0.000000e+00> : vector<128x8xf32>
    %50 = tpu.matmul %48, %49, %cst_14 {dimension_numbers = #tpu.dot_dimension_numbers<[1], [0], [0], [1], [0, 0, 1, 1], [], []>} : vector<128x72xf32>, vector<72x8xf32>, vector<128x8xf32> -> vector<128x8xf32>
    %c0_15 = arith.constant 0 : index
    %c0_16 = arith.constant 0 : index
    %51 = vector.load %arg6[%c0_15, %c0_16] : memref<1x8xf32, #tpu.memory_space<vmem>>, vector<1x8xf32>
    %52 = vector.broadcast %51 : vector<1x8xf32> to vector<128x8xf32>
    %53 = arith.addf %50, %52 : vector<128x8xf32>
    %cst_17 = arith.constant 0.000000e+00 : f32
    %54 = vector.broadcast %cst_17 : f32 to vector<128x8xf32>
    %55 = arith.cmpf ogt, %53, %54 : vector<128x8xf32>
    %cst_18 = arith.constant 0.00999999977 : f32
    %56 = vector.broadcast %cst_18 : f32 to vector<128x8xf32>
    %57 = arith.mulf %56, %53 : vector<128x8xf32>
    %58 = arith.select %55, %53, %57 : vector<128x8xi1>, vector<128x8xf32>
    %59 = vector.shape_cast %58 : vector<128x8xf32> to vector<8x16x8xf32>
    %c0_19 = arith.constant 0 : index
    %c0_20 = arith.constant 0 : index
    %c0_21 = arith.constant 0 : index
    %c0_22 = arith.constant 0 : index
    %c0_23 = arith.constant 0 : index
    %60 = vector.load %arg7[%c0_19, %c0_20, %c0_21, %c0_22, %c0_23] : memref<1x1x8x16x8xf32, #tpu.memory_space<vmem>>, vector<1x1x8x16x8xf32>
    %61 = vector.shape_cast %60 : vector<1x1x8x16x8xf32> to vector<8x16x8xf32>
    %62 = vector.shape_cast %59 : vector<8x16x8xf32> to vector<1x1x8x16x8xf32>
    tpu.vector_store %arg7[%c0_19, %c0_20, %c0_21, %c0_22, %c0_23], %62 {strides = array<i32>} : memref<1x1x8x16x8xf32, #tpu.memory_space<vmem>>, vector<1x1x8x16x8xf32>,
    return
  }
  func.func @transform_0(%arg0: i32, %arg1: i32) -> (i32, i32, i32, i32, i32) {
    %c0_i32 = arith.constant 0 : i32
    %c0_i32_0 = arith.constant 0 : i32
    %c0_i32_1 = arith.constant 0 : i32
    %c0_i32_2 = arith.constant 0 : i32
    return %arg0, %arg1, %c0_i32, %c0_i32_0, %c0_i32_1 : i32, i32, i32, i32, i32
  }
  func.func @transform_1(%arg0: i32, %arg1: i32) -> (i32, i32) {
    %c0_i32 = arith.constant 0 : i32
    %c0_i32_0 = arith.constant 0 : i32
    %c0_i32_1 = arith.constant 0 : i32
    return %c0_i32, %c0_i32_0 : i32, i32
  }
  func.func @transform_2(%arg0: i32, %arg1: i32) -> (i32, i32) {
    %c0_i32 = arith.constant 0 : i32
    %c0_i32_0 = arith.constant 0 : i32
    %c0_i32_1 = arith.constant 0 : i32
    return %c0_i32, %c0_i32_0 : i32, i32
  }
  func.func @transform_3(%arg0: i32, %arg1: i32) -> (i32, i32) {
    %c0_i32 = arith.constant 0 : i32
    %c0_i32_0 = arith.constant 0 : i32
    %c0_i32_1 = arith.constant 0 : i32
    return %c0_i32, %c0_i32_0 : i32, i32
  }
  func.func @transform_4(%arg0: i32, %arg1: i32) -> (i32, i32) {
    %c0_i32 = arith.constant 0 : i32
    %c0_i32_0 = arith.constant 0 : i32
    %c0_i32_1 = arith.constant 0 : i32
    return %c0_i32, %c0_i32_0 : i32, i32
  }
  func.func @transform_5(%arg0: i32, %arg1: i32) -> (i32, i32, i32, i32, i32) {
    %c0_i32 = arith.constant 0 : i32
    %c0_i32_0 = arith.constant 0 : i32
    %c0_i32_1 = arith.constant 0 : i32
    %c0_i32_2 = arith.constant 0 : i32
    return %arg0, %arg1, %c0_i32, %c0_i32_0, %c0_i32_1 : i32, i32, i32, i32, i32
  }
}

</mosaic_0001>

<llo_original>
// kernel: tpu_custom_call.1
$region0: #{tpu_custom_call.1}
  #allocation0 [shape = 'u32[]', space=smem, size = 0x4, offset = 0x4, fixed_abs, tag = 'smem constant byte address 0x4 - core index']
  #allocation1 [shape = 'u32[144,128]{1,0:T(1,128)}', space=vmem, size = 0x12000, scoped, tag = 'internal scratch']
  %s0 = inlined_call_operand.vmem [shape: f32[2,2,12,18,4], index: 0, kind: input, shape index: {}]
  %s1 = inlined_call_operand.vmem [shape: f32[36,8], index: 1, kind: input, shape index: {}]
  %s2 = inlined_call_operand.vmem [shape: f32[1,8], index: 2, kind: input, shape index: {}]
  %s3 = inlined_call_operand.vmem [shape: f32[72,8], index: 3, kind: input, shape index: {}]
  %s4 = inlined_call_operand.vmem [shape: f32[1,8], index: 4, kind: input, shape index: {}]
  %s5 = inlined_call_operand.vmem [shape: f32[2,2,8,16,8], index: 5, kind: output, shape index: {}]
  %s6 = sld [smem:[#allocation0]]
  $region53: #{tpu_custom_call.1} parent=0
    _
  %s8 = ssub.s32 1, %s6
  %s9 = scalar_select 0, %s8, %s6
  loop: start=0, step=1, limit=6
  $region2: #{tpu_custom_call.1} parent=0 // loop_pre_header
    _
  $region3: #{tpu_custom_call.1} parent=0 // loop_header
    %s11 = sphi 0, %s15
    %p12 = scmp.ge.s32.totalorder %s11, 6
    %s18 = sphi 0, %s30
    %s19 = sphi 0, %s26
    %s20 = sphi 0, %s18
    %s21 = sphi 0, %s19
    %s22 = sphi 0, %s20
    %s23 = sphi 0, %s21
    %s35 = sphi 0, %s37
    %s38 = sphi 0, %s35
    %s39 = sphi 0, %s38
    %s55 = sphi 0, %s39
    %s59 = sphi 0, %s59
    %s61 = sphi 0, %s59
    %s62 = sphi 0, %s61
    %s76 = sphi 0, %s62
    %s80 = sphi 0, %s80
    %s82 = sphi 0, %s80
    %s83 = sphi 0, %s82
    %s97 = sphi 0, %s83
    %s101 = sphi 0, %s101
    %s103 = sphi 0, %s101
    %s104 = sphi 0, %s103
    %s118 = sphi 0, %s104
    %s122 = sphi 0, %s122
    %s124 = sphi 0, %s122
    %s125 = sphi 0, %s124
    %s139 = sphi 0, %s125
    %s147 = sphi 0, %s149
    %s150 = sphi 0, %s147
    %s151 = sphi 0, %s150
    %s167 = sphi 0, %s151
  $region4: #{tpu_custom_call.1} parent=0 // loop_header_branch
    %14 = sbr.rel (%p12) target = $region8
  $region5: #{tpu_custom_call.1} parent=0 // loop_body
    %s16 = ssub.s32 %s11, 1
    %s17 = ssub.s32 %s11, 2
    %s24 = sadd.s32 1, %s19
    %p25 = scmp.ge.s32.totalorder %s24, 2
    %s26 = scalar_select %p25, 0, %s24
    %s27 = sadd.s32 1, %s18
    %s28 = scalar_select %p25, %s27, %s18
    %p29 = scmp.ge.s32.totalorder %s28, 2
    %s30 = scalar_select %p29, 0, %s28
    %s31 = ssub.s32 %s18, %s30
    %s32 = ssub.s32 %s19, %s26
    %s33 = sor.u32 %s31, %s32
    %p34 = scmp.eq.s32.totalorder %s33, 0
    %s36 = sadd.s32 %s35, 1
    %s37 = scalar_select %p34, %s35, %s36
    %p40 = pneg %p34
    %p41 = scmp.eq.s32.totalorder %s11, 3
    %p42 = por %p40, %p41
    %p43 = scmp.ne.s32.totalorder %s35, %s38
    %p44 = scmp.eq.s32.totalorder %s11, 0
    %p45 = por %p43, %p44
    %p46 = scmp.ne.s32.totalorder %s35, %s38
    %p47 = scmp.eq.s32.totalorder %s16, 3
    %p48 = por %p46, %p47
    %p49 = scmp.ne.s32.totalorder %s38, %s39
    %p50 = scmp.eq.s32.totalorder %s16, 0
    %p51 = por %p49, %p50
    %p52 = scmp.ne.s32.totalorder %s38, %s39
    %p53 = scmp.eq.s32.totalorder %s17, 3
    %p54 = por %p52, %p53
    %p56 = scmp.ne.s32.totalorder %s39, %s55
    %p57 = scmp.eq.s32.totalorder %s17, 0
    %p58 = por %p56, %p57
    %s60 = sadd.s32 %s59, 1
    %p63 = scmp.eq.s32.totalorder %s11, 3
    %p64 = scmp.ne.s32.totalorder %s59, %s61
    %p65 = scmp.eq.s32.totalorder %s11, 0
    %p66 = por %p64, %p65
    %p67 = scmp.ne.s32.totalorder %s59, %s61
    %p68 = scmp.eq.s32.totalorder %s16, 3
    %p69 = por %p67, %p68
    %p70 = scmp.ne.s32.totalorder %s61, %s62
    %p71 = scmp.eq.s32.totalorder %s16, 0
    %p72 = por %p70, %p71
    %p73 = scmp.ne.s32.totalorder %s61, %s62
    %p74 = scmp.eq.s32.totalorder %s17, 3
    %p75 = por %p73, %p74
    %p77 = scmp.ne.s32.totalorder %s62, %s76
    %p78 = scmp.eq.s32.totalorder %s17, 0
    %p79 = por %p77, %p78
    %s81 = sadd.s32 %s80, 1
    %p84 = scmp.eq.s32.totalorder %s11, 3
    %p85 = scmp.ne.s32.totalorder %s80, %s82
    %p86 = scmp.eq.s32.totalorder %s11, 0
    %p87 = por %p85, %p86
    %p88 = scmp.ne.s32.totalorder %s80, %s82
    %p89 = scmp.eq.s32.totalorder %s16, 3
    %p90 = por %p88, %p89
    %p91 = scmp.ne.s32.totalorder %s82, %s83
    %p92 = scmp.eq.s32.totalorder %s16, 0
    %p93 = por %p91, %p92
    %p94 = scmp.ne.s32.totalorder %s82, %s83
    %p95 = scmp.eq.s32.totalorder %s17, 3
    %p96 = por %p94, %p95
    %p98 = scmp.ne.s32.totalorder %s83, %s97
    %p99 = scmp.eq.s32.totalorder %s17, 0
    %p100 = por %p98, %p99
    %s102 = sadd.s32 %s101, 1
    %p105 = scmp.eq.s32.totalorder %s11, 3
    %p106 = scmp.ne.s32.totalorder %s101, %s103
    %p107 = scmp.eq.s32.totalorder %s11, 0
    %p108 = por %p106, %p107
    %p109 = scmp.ne.s32.totalorder %s101, %s103
    %p110 = scmp.eq.s32.totalorder %s16, 3
    %p111 = por %p109, %p110
    %p112 = scmp.ne.s32.totalorder %s103, %s104
    %p113 = scmp.eq.s32.totalorder %s16, 0
    %p114 = por %p112, %p113
    %p115 = scmp.ne.s32.totalorder %s103, %s104
    %p116 = scmp.eq.s32.totalorder %s17, 3
    %p117 = por %p115, %p116
    %p119 = scmp.ne.s32.totalorder %s104, %s118
    %p120 = scmp.eq.s32.totalorder %s17, 0
    %p121 = por %p119, %p120
    %s123 = sadd.s32 %s122, 1
    %p126 = scmp.eq.s32.totalorder %s11, 3
    %p127 = scmp.ne.s32.totalorder %s122, %s124
    %p128 = scmp.eq.s32.totalorder %s11, 0
    %p129 = por %p127, %p128
    %p130 = scmp.ne.s32.totalorder %s122, %s124
    %p131 = scmp.eq.s32.totalorder %s16, 3
    %p132 = por %p130, %p131
    %p133 = scmp.ne.s32.totalorder %s124, %s125
    %p134 = scmp.eq.s32.totalorder %s16, 0
    %p135 = por %p133, %p134
    %p136 = scmp.ne.s32.totalorder %s124, %s125
    %p137 = scmp.eq.s32.totalorder %s17, 3
    %p138 = por %p136, %p137
    %p140 = scmp.ne.s32.totalorder %s125, %s139
    %p141 = scmp.eq.s32.totalorder %s17, 0
    %p142 = por %p140, %p141
    %s143 = ssub.s32 %s18, %s30
    %s144 = ssub.s32 %s19, %s26
    %s145 = sor.u32 %s143, %s144
    %p146 = scmp.eq.s32.totalorder %s145, 0
    %s148 = sadd.s32 %s147, 1
    %s149 = scalar_select %p146, %s147, %s148
    %p152 = pneg %p146
    %p153 = scmp.eq.s32.totalorder %s11, 3
    %p154 = por %p152, %p153
    %p155 = scmp.ne.s32.totalorder %s147, %s150
    %p156 = scmp.eq.s32.totalorder %s11, 0
    %p157 = por %p155, %p156
    %p158 = scmp.ne.s32.totalorder %s147, %s150
    %p159 = scmp.eq.s32.totalorder %s16, 3
    %p160 = por %p158, %p159
    %p161 = scmp.ne.s32.totalorder %s150, %s151
    %p162 = scmp.eq.s32.totalorder %s16, 0
    %p163 = por %p161, %p162
    %p164 = scmp.ne.s32.totalorder %s150, %s151
    %p165 = scmp.eq.s32.totalorder %s17, 3
    %p166 = por %p164, %p165
    %p168 = scmp.ne.s32.totalorder %s151, %s167
    %p169 = scmp.eq.s32.totalorder %s17, 0
    %p170 = por %p168, %p169
    %p171 = scmp.le.s32.totalorder 1, %s11
    %p172 = scmp.lt.s32.totalorder %s11, 5
    %p173 = pnand %p171, %p172
    %p174 = pneg %p173
    // Predicated region
    $region9: #{tpu_custom_call.1} parent=5 // pred_check
      _
    $region10: #{tpu_custom_call.1} parent=5 // pred_check_branch
      %176 = sbr.rel (%p173) target = $region12
    $region11: #{tpu_custom_call.1} parent=5 // pred_region
      %s177 = ssub.s32 %s11, 1
      // Predicated region
      $region13: #{tpu_custom_call.1} parent=11 // pred_check
        %p178 = pneg %p72
      $region14: #{tpu_custom_call.1} parent=11 // pred_check_branch
        %180 = sbr.rel (%p178) target = $region16
      $region15: #{tpu_custom_call.1} parent=11 // pred_region
        _
      $region16: #{tpu_custom_call.1} parent=11 // pred_fallthru
        _
      // Predicated region
      $region17: #{tpu_custom_call.1} parent=11 // pred_check
        %p181 = pneg %p93
      $region18: #{tpu_custom_call.1} parent=11 // pred_check_branch
        %183 = sbr.rel (%p181) target = $region20
      $region19: #{tpu_custom_call.1} parent=11 // pred_region
        _
      $region20: #{tpu_custom_call.1} parent=11 // pred_fallthru
        _
      // Predicated region
      $region21: #{tpu_custom_call.1} parent=11 // pred_check
        %p184 = pneg %p114
      $region22: #{tpu_custom_call.1} parent=11 // pred_check_branch
        %186 = sbr.rel (%p184) target = $region24
      $region23: #{tpu_custom_call.1} parent=11 // pred_region
        _
      $region24: #{tpu_custom_call.1} parent=11 // pred_fallthru
        _
      // Predicated region
      $region25: #{tpu_custom_call.1} parent=11 // pred_check
        %p187 = pneg %p135
      $region26: #{tpu_custom_call.1} parent=11 // pred_check_branch
        %189 = sbr.rel (%p187) target = $region28
      $region27: #{tpu_custom_call.1} parent=11 // pred_region
        _
      $region28: #{tpu_custom_call.1} parent=11 // pred_fallthru
        _
    $region12: #{tpu_custom_call.1} parent=5 // pred_fallthru
      _
    %p190 = scmp.lt.s32.totalorder %s11, 4
    // Predicated region
    $region29: #{tpu_custom_call.1} parent=5 // pred_check
      %p191 = pneg %p190
    $region30: #{tpu_custom_call.1} parent=5 // pred_check_branch
      %193 = sbr.rel (%p191) target = $region32
    $region31: #{tpu_custom_call.1} parent=5 // pred_region
      // Predicated region
      $region33: #{tpu_custom_call.1} parent=31 // pred_check
        %p194 = pneg %p45
      $region34: #{tpu_custom_call.1} parent=31 // pred_check_branch
        %196 = sbr.rel (%p194) target = $region36
      $region35: #{tpu_custom_call.1} parent=31 // pred_region
        %p197 = scmp.lt.s32.totalorder %s18, 1
        %s198 = scalar_select %p197, %s18, 1
        %p199 = scmp.lt.s32.totalorder %s19, 1
        %s200 = scalar_select %p199, %s19, 1
        %s201 = smul.addr %s200, 36
        %s202 = smul.addr %s198, 72
        %s203 = sadd.s32 %s201, %s202
        %s204 = smul.addr %s203, 8
        %s205 = scalar_lea.vmem %s0, %s204
      $region36: #{tpu_custom_call.1} parent=31 // pred_fallthru
        _
    $region32: #{tpu_custom_call.1} parent=5 // pred_fallthru
      _
    %p206 = scmp.le.s32.totalorder 1, %s11
    %p207 = scmp.lt.s32.totalorder %s11, 5
    %p208 = pnand %p206, %p207
    %p209 = pneg %p208
    // Predicated region
    $region37: #{tpu_custom_call.1} parent=5 // pred_check
      _
    $region38: #{tpu_custom_call.1} parent=5 // pred_check_branch
      %211 = sbr.rel (%p208) target = $region40
    $region39: #{tpu_custom_call.1} parent=5 // pred_region
      %s212 = ssub.s32 %s11, 1
      %p213 = scmp.lt.s32.totalorder %s20, 1
      %s214 = scalar_select %p213, %s20, 1
      %p215 = scmp.lt.s32.totalorder %s21, 1
      %s216 = scalar_select %p215, %s21, 1
      %s217 = smul.addr %s216, 36
      %s218 = smul.addr %s214, 72
      %s219 = sadd.s32 %s217, %s218
      %s220 = smul.addr %s219, 8
      %s221 = scalar_lea.vmem %s0, %s220
      %p222 = pneg %p51
      %p223 = pneg %p48
      %p224 = pneg %p72
      %p225 = pneg %p69
      %p226 = pneg %p93
      %p227 = pneg %p90
      %p228 = pneg %p114
      %p229 = pneg %p111
      %p230 = pneg %p135
      %p231 = pneg %p132
      %p232 = pneg %p163
      %p233 = pneg %p160
      %p234 = scmp.lt.s32.totalorder %s20, 1
      %s235 = scalar_select %p234, %s20, 1
      %p236 = scmp.lt.s32.totalorder %s21, 1
      %s237 = scalar_select %p236, %s21, 1
      %s238 = smul.addr %s237, 16
      %s239 = smul.addr %s235, 32
      %s240 = sadd.s32 %s238, %s239
      %s241 = smul.addr %s240, 8
      %s242 = scalar_lea.vmem %s5, %s241
      %p243 = scmp.lt.s32.totalorder %s20, 1
      %s244 = scalar_select %p243, %s20, 1
      %p245 = scmp.lt.s32.totalorder %s21, 1
      %s246 = scalar_select %p245, %s21, 1
      %s247 = smul.addr %s246, 36
      %s248 = smul.addr %s244, 72
      %s249 = sadd.s32 %s247, %s248
      %s250 = smul.addr %s249, 8
      %s251 = scalar_lea.vmem %s0, %s250
      %p252 = scmp.lt.s32.totalorder %s20, 1
      %s253 = scalar_select %p252, %s20, 1
      %p254 = scmp.lt.s32.totalorder %s21, 1
      %s255 = scalar_select %p254, %s21, 1
      %s256 = smul.addr %s255, 16
      %s257 = smul.addr %s253, 32
      %s258 = sadd.s32 %s256, %s257
      %s259 = smul.addr %s258, 8
      %s260 = scalar_lea.vmem %s5, %s259
      %v261 = vld [vmem:[%s251] sm:$0xff]
      %v262 = vld [vmem:[%s251 + $0x8] sm:$0xff]
      %v263 = vld [vmem:[%s251 + $0x10] sm:$0x3]
      %v264 = vld [vmem:[%s251 + $0x18] sm:$0xff]
      %v265 = vld [vmem:[%s251 + $0x20] sm:$0xff]
      %v266 = vld [vmem:[%s251 + $0x28] sm:$0x3]
      %v267 = vld [vmem:[%s251 + $0x30] sm:$0xff]
      %v268 = vld [vmem:[%s251 + $0x38] sm:$0xff]
      %v269 = vld [vmem:[%s251 + $0x40] sm:$0x3]
      %v270 = vld [vmem:[%s251 + $0x48] sm:$0xff]
      %v271 = vld [vmem:[%s251 + $0x50] sm:$0xff]
      %v272 = vld [vmem:[%s251 + $0x58] sm:$0x3]
      %v273 = vld [vmem:[%s251 + $0x60] sm:$0xff]
      %v274 = vld [vmem:[%s251 + $0x68] sm:$0xff]
      %v275 = vld [vmem:[%s251 + $0x70] sm:$0x3]
      %v276 = vld [vmem:[%s251 + $0x78] sm:$0xff]
      %v277 = vld [vmem:[%s251 + $0x80] sm:$0xff]
      %v278 = vld [vmem:[%s251 + $0x88] sm:$0x3]
      %v279 = vld [vmem:[%s251 + $0x90] sm:$0xff]
      %v280 = vld [vmem:[%s251 + $0x98] sm:$0xff]
      %v281 = vld [vmem:[%s251 + $0xa0] sm:$0x3]
      %v282 = vld [vmem:[%s251 + $0xa8] sm:$0xff]
      %v283 = vld [vmem:[%s251 + $0xb0] sm:$0xff]
      %v284 = vld [vmem:[%s251 + $0xb8] sm:$0x3]
      %v285 = vld [vmem:[%s251 + $0xc0] sm:$0xff]
      %v286 = vld [vmem:[%s251 + $0xc8] sm:$0xff]
      %v287 = vld [vmem:[%s251 + $0xd0] sm:$0x3]
      %v288 = vld [vmem:[%s251 + $0xd8] sm:$0xff]
      %v289 = vld [vmem:[%s251 + $0xe0] sm:$0xff]
      %v290 = vld [vmem:[%s251 + $0xe8] sm:$0x3]
      %v291 = vld [vmem:[%s251 + $0xf0] sm:$0xff]
      %v292 = vld [vmem:[%s251 + $0xf8] sm:$0xff]
      %v293 = vld [vmem:[%s251 + $0x100] sm:$0x3]
      %v294 = vld [vmem:[%s251 + $0x108] sm:$0xff]
      %v295 = vld [vmem:[%s251 + $0x110] sm:$0xff]
      %v296 = vld [vmem:[%s251 + $0x118] sm:$0x3]
      %vm327 = vcmask 1046528
      %v328 = vrot.slane %v261, 1
      %v329 = vrot.slane %v262, 1
      %v330 = vsel %vm327, %v328, %v329
      %v331 = vrot.slane %v263, 1
      %v332 = vsel %vm327, %v329, %v331
      %v333 = vrot.slane %v264, 1
      %v334 = vrot.slane %v265, 1
      %v335 = vsel %vm327, %v333, %v334
      %v336 = vrot.slane %v266, 1
      %v337 = vsel %vm327, %v334, %v336
      %v338 = vrot.slane %v267, 1
      %v339 = vrot.slane %v268, 1
      %v340 = vsel %vm327, %v338, %v339
      %v341 = vrot.slane %v269, 1
      %v342 = vsel %vm327, %v339, %v341
      %v343 = vrot.slane %v270, 1
      %v344 = vrot.slane %v271, 1
      %v345 = vsel %vm327, %v343, %v344
      %v346 = vrot.slane %v272, 1
      %v347 = vsel %vm327, %v344, %v346
      %v348 = vrot.slane %v273, 1
      %v349 = vrot.slane %v274, 1
      %v350 = vsel %vm327, %v348, %v349
      %v351 = vrot.slane %v275, 1
      %v352 = vsel %vm327, %v349, %v351
      %v353 = vrot.slane %v276, 1
      %v354 = vrot.slane %v277, 1
      %v355 = vsel %vm327, %v353, %v354
      %v356 = vrot.slane %v278, 1
      %v357 = vsel %vm327, %v354, %v356
      %v358 = vrot.slane %v279, 1
      %v359 = vrot.slane %v280, 1
      %v360 = vsel %vm327, %v358, %v359
      %v361 = vrot.slane %v281, 1
      %v362 = vsel %vm327, %v359, %v361
      %v363 = vrot.slane %v282, 1
      %v364 = vrot.slane %v283, 1
      %v365 = vsel %vm327, %v363, %v364
      %v366 = vrot.slane %v284, 1
      %v367 = vsel %vm327, %v364, %v366
      %v368 = vrot.slane %v285, 1
      %v369 = vrot.slane %v286, 1
      %v370 = vsel %vm327, %v368, %v369
      %v371 = vrot.slane %v287, 1
      %v372 = vsel %vm327, %v369, %v371
      %v373 = vrot.slane %v288, 1
      %v374 = vrot.slane %v289, 1
      %v375 = vsel %vm327, %v373, %v374
      %v376 = vrot.slane %v290, 1
      %v377 = vsel %vm327, %v374, %v376
      %378 = vrot.lane.b32.xlu0 %v330, 4
      %v379 = vpop.permute.xlu0 %378
      %380 = vrot.lane.b32.xlu0 %v332, 4
      %v381 = vpop.permute.xlu0 %380
      %382 = vrot.lane.b32.xlu0 %v335, 4
      %v383 = vpop.permute.xlu0 %382
      %384 = vrot.lane.b32.xlu0 %v337, 4
      %v385 = vpop.permute.xlu0 %384
      %386 = vrot.lane.b32.xlu0 %v340, 4
      %v387 = vpop.permute.xlu0 %386
      %388 = vrot.lane.b32.xlu0 %v342, 4
      %v389 = vpop.permute.xlu0 %388
      %390 = vrot.lane.b32.xlu0 %v345, 4
      %v391 = vpop.permute.xlu0 %390
      %392 = vrot.lane.b32.xlu0 %v347, 4
      %v393 = vpop.permute.xlu0 %392
      %394 = vrot.lane.b32.xlu0 %v350, 4
      %v395 = vpop.permute.xlu0 %394
      %396 = vrot.lane.b32.xlu0 %v352, 4
      %v397 = vpop.permute.xlu0 %396
      %398 = vrot.lane.b32.xlu0 %v355, 4
      %v399 = vpop.permute.xlu0 %398
      %400 = vrot.lane.b32.xlu0 %v357, 4
      %v401 = vpop.permute.xlu0 %400
      %402 = vrot.lane.b32.xlu0 %v360, 4
      %v403 = vpop.permute.xlu0 %402
      %404 = vrot.lane.b32.xlu0 %v362, 4
      %v405 = vpop.permute.xlu0 %404
      %406 = vrot.lane.b32.xlu0 %v365, 4
      %v407 = vpop.permute.xlu0 %406
      %408 = vrot.lane.b32.xlu0 %v367, 4
      %v409 = vpop.permute.xlu0 %408
      %410 = vrot.lane.b32.xlu0 %v370, 4
      %v411 = vpop.permute.xlu0 %410
      %412 = vrot.lane.b32.xlu0 %v372, 4
      %v413 = vpop.permute.xlu0 %412
      %414 = vrot.lane.b32.xlu0 %v375, 4
      %v415 = vpop.permute.xlu0 %414
      %416 = vrot.lane.b32.xlu0 %v377, 4
      %v417 = vpop.permute.xlu0 %416
      %vm438 = vcmask 1045504
      %v439 = vrot.slane %v261, 2
      %v440 = vrot.slane %v262, 2
      %v441 = vsel %vm438, %v439, %v440
      %v442 = vrot.slane %v263, 2
      %v443 = vsel %vm438, %v440, %v442
      %v444 = vrot.slane %v264, 2
      %v445 = vrot.slane %v265, 2
      %v446 = vsel %vm438, %v444, %v445
      %v447 = vrot.slane %v266, 2
      %v448 = vsel %vm438, %v445, %v447
      %v449 = vrot.slane %v267, 2
      %v450 = vrot.slane %v268, 2
      %v451 = vsel %vm438, %v449, %v450
      %v452 = vrot.slane %v269, 2
      %v453 = vsel %vm438, %v450, %v452
      %v454 = vrot.slane %v270, 2
      %v455 = vrot.slane %v271, 2
      %v456 = vsel %vm438, %v454, %v455
      %v457 = vrot.slane %v272, 2
      %v458 = vsel %vm438, %v455, %v457
      %v459 = vrot.slane %v273, 2
      %v460 = vrot.slane %v274, 2
      %v461 = vsel %vm438, %v459, %v460
      %v462 = vrot.slane %v275, 2
      %v463 = vsel %vm438, %v460, %v462
      %v464 = vrot.slane %v276, 2
      %v465 = vrot.slane %v277, 2
      %v466 = vsel %vm438, %v464, %v465
      %v467 = vrot.slane %v278, 2
      %v468 = vsel %vm438, %v465, %v467
      %v469 = vrot.slane %v279, 2
      %v470 = vrot.slane %v280, 2
      %v471 = vsel %vm438, %v469, %v470
      %v472 = vrot.slane %v281, 2
      %v473 = vsel %vm438, %v470, %v472
      %v474 = vrot.slane %v282, 2
      %v475 = vrot.slane %v283, 2
      %v476 = vsel %vm438, %v474, %v475
      %v477 = vrot.slane %v284, 2
      %v478 = vsel %vm438, %v475, %v477
      %v479 = vrot.slane %v285, 2
      %v480 = vrot.slane %v286, 2
      %v481 = vsel %vm438, %v479, %v480
      %v482 = vrot.slane %v287, 2
      %v483 = vsel %vm438, %v480, %v482
      %v484 = vrot.slane %v288, 2
      %v485 = vrot.slane %v289, 2
      %v486 = vsel %vm438, %v484, %v485
      %v487 = vrot.slane %v290, 2
      %v488 = vsel %vm438, %v485, %v487
      %489 = vrot.lane.b32.xlu0 %v441, 8
      %v490 = vpop.permute.xlu0 %489
      %491 = vrot.lane.b32.xlu0 %v443, 8
      %v492 = vpop.permute.xlu0 %491
      %493 = vrot.lane.b32.xlu0 %v446, 8
      %v494 = vpop.permute.xlu0 %493
      %495 = vrot.lane.b32.xlu0 %v448, 8
      %v496 = vpop.permute.xlu0 %495
      %497 = vrot.lane.b32.xlu0 %v451, 8
      %v498 = vpop.permute.xlu0 %497
      %499 = vrot.lane.b32.xlu0 %v453, 8
      %v500 = vpop.permute.xlu0 %499
      %501 = vrot.lane.b32.xlu0 %v456, 8
      %v502 = vpop.permute.xlu0 %501
      %503 = vrot.lane.b32.xlu0 %v458, 8
      %v504 = vpop.permute.xlu0 %503
      %505 = vrot.lane.b32.xlu0 %v461, 8
      %v506 = vpop.permute.xlu0 %505
      %507 = vrot.lane.b32.xlu0 %v463, 8
      %v508 = vpop.permute.xlu0 %507
      %509 = vrot.lane.b32.xlu0 %v466, 8
      %v510 = vpop.permute.xlu0 %509
      %511 = vrot.lane.b32.xlu0 %v468, 8
      %v512 = vpop.permute.xlu0 %511
      %513 = vrot.lane.b32.xlu0 %v471, 8
      %v514 = vpop.permute.xlu0 %513
      %515 = vrot.lane.b32.xlu0 %v473, 8
      %v516 = vpop.permute.xlu0 %515
      %517 = vrot.lane.b32.xlu0 %v476, 8
      %v518 = vpop.permute.xlu0 %517
      %519 = vrot.lane.b32.xlu0 %v478, 8
      %v520 = vpop.permute.xlu0 %519
      %521 = vrot.lane.b32.xlu0 %v481, 8
      %v522 = vpop.permute.xlu0 %521
      %523 = vrot.lane.b32.xlu0 %v483, 8
      %v524 = vpop.permute.xlu0 %523
      %525 = vrot.lane.b32.xlu0 %v486, 8
      %v526 = vpop.permute.xlu0 %525
      %527 = vrot.lane.b32.xlu0 %v488, 8
      %v528 = vpop.permute.xlu0 %527
      %551 = vrot.lane.b32.xlu0 %v264, 12
      %v552 = vpop.permute.xlu0 %551
      %553 = vrot.lane.b32.xlu0 %v265, 12
      %v554 = vpop.permute.xlu0 %553
      %555 = vrot.lane.b32.xlu0 %v267, 12
      %v556 = vpop.permute.xlu0 %555
      %557 = vrot.lane.b32.xlu0 %v268, 12
      %v558 = vpop.permute.xlu0 %557
      %559 = vrot.lane.b32.xlu0 %v270, 12
      %v560 = vpop.permute.xlu0 %559
      %561 = vrot.lane.b32.xlu0 %v271, 12
      %v562 = vpop.permute.xlu0 %561
      %563 = vrot.lane.b32.xlu0 %v273, 12
      %v564 = vpop.permute.xlu0 %563
      %565 = vrot.lane.b32.xlu0 %v274, 12
      %v566 = vpop.permute.xlu0 %565
      %567 = vrot.lane.b32.xlu0 %v276, 12
      %v568 = vpop.permute.xlu0 %567
      %569 = vrot.lane.b32.xlu0 %v277, 12
      %v570 = vpop.permute.xlu0 %569
      %571 = vrot.lane.b32.xlu0 %v279, 12
      %v572 = vpop.permute.xlu0 %571
      %573 = vrot.lane.b32.xlu0 %v280, 12
      %v574 = vpop.permute.xlu0 %573
      %575 = vrot.lane.b32.xlu0 %v282, 12
      %v576 = vpop.permute.xlu0 %575
      %577 = vrot.lane.b32.xlu0 %v283, 12
      %v578 = vpop.permute.xlu0 %577
      %579 = vrot.lane.b32.xlu0 %v285, 12
      %v580 = vpop.permute.xlu0 %579
      %581 = vrot.lane.b32.xlu0 %v286, 12
      %v582 = vpop.permute.xlu0 %581
      %583 = vrot.lane.b32.xlu0 %v288, 12
      %v584 = vpop.permute.xlu0 %583
      %585 = vrot.lane.b32.xlu0 %v289, 12
      %v586 = vpop.permute.xlu0 %585
      %587 = vrot.lane.b32.xlu0 %v291, 12
      %v588 = vpop.permute.xlu0 %587
      %589 = vrot.lane.b32.xlu0 %v292, 12
      %v590 = vpop.permute.xlu0 %589
      %v612 = vrot.slane %v291, 1
      %v613 = vrot.slane %v292, 1
      %v614 = vsel %vm327, %v612, %v613
      %v615 = vrot.slane %v293, 1
      %v616 = vsel %vm327, %v613, %v615
      %617 = vrot.lane.b32.xlu0 %v335, 16
      %v618 = vpop.permute.xlu0 %617
      %619 = vrot.lane.b32.xlu0 %v337, 16
      %v620 = vpop.permute.xlu0 %619
      %621 = vrot.lane.b32.xlu0 %v340, 16
      %v622 = vpop.permute.xlu0 %621
      %623 = vrot.lane.b32.xlu0 %v342, 16
      %v624 = vpop.permute.xlu0 %623
      %625 = vrot.lane.b32.xlu0 %v345, 16
      %v626 = vpop.permute.xlu0 %625
      %627 = vrot.lane.b32.xlu0 %v347, 16
      %v628 = vpop.permute.xlu0 %627
      %629 = vrot.lane.b32.xlu0 %v350, 16
      %v630 = vpop.permute.xlu0 %629
      %631 = vrot.lane.b32.xlu0 %v352, 16
      %v632 = vpop.permute.xlu0 %631
      %633 = vrot.lane.b32.xlu0 %v355, 16
      %v634 = vpop.permute.xlu0 %633
      %635 = vrot.lane.b32.xlu0 %v357, 16
      %v636 = vpop.permute.xlu0 %635
      %637 = vrot.lane.b32.xlu0 %v360, 16
      %v638 = vpop.permute.xlu0 %637
      %639 = vrot.lane.b32.xlu0 %v362, 16
      %v640 = vpop.permute.xlu0 %639
      %641 = vrot.lane.b32.xlu0 %v365, 16
      %v642 = vpop.permute.xlu0 %641
      %643 = vrot.lane.b32.xlu0 %v367, 16
      %v644 = vpop.permute.xlu0 %643
      %645 = vrot.lane.b32.xlu0 %v370, 16
      %v646 = vpop.permute.xlu0 %645
      %647 = vrot.lane.b32.xlu0 %v372, 16
      %v648 = vpop.permute.xlu0 %647
      %649 = vrot.lane.b32.xlu0 %v375, 16
      %v650 = vpop.permute.xlu0 %649
      %651 = vrot.lane.b32.xlu0 %v377, 16
      %v652 = vpop.permute.xlu0 %651
      %653 = vrot.lane.b32.xlu0 %v614, 16
      %v654 = vpop.permute.xlu0 %653
      %655 = vrot.lane.b32.xlu0 %v616, 16
      %v656 = vpop.permute.xlu0 %655
      %v677 = vrot.slane %v291, 2
      %v678 = vrot.slane %v292, 2
      %v679 = vsel %vm438, %v677, %v678
      %v680 = vrot.slane %v293, 2
      %v681 = vsel %vm438, %v678, %v680
      %682 = vrot.lane.b32.xlu0 %v446, 20
      %v683 = vpop.permute.xlu0 %682
      %684 = vrot.lane.b32.xlu0 %v448, 20
      %v685 = vpop.permute.xlu0 %684
      %686 = vrot.lane.b32.xlu0 %v451, 20
      %v687 = vpop.permute.xlu0 %686
      %688 = vrot.lane.b32.xlu0 %v453, 20
      %v689 = vpop.permute.xlu0 %688
      %690 = vrot.lane.b32.xlu0 %v456, 20
      %v691 = vpop.permute.xlu0 %690
      %692 = vrot.lane.b32.xlu0 %v458, 20
      %v693 = vpop.permute.xlu0 %692
      %694 = vrot.lane.b32.xlu0 %v461, 20
      %v695 = vpop.permute.xlu0 %694
      %696 = vrot.lane.b32.xlu0 %v463, 20
      %v697 = vpop.permute.xlu0 %696
      %698 = vrot.lane.b32.xlu0 %v466, 20
      %v699 = vpop.permute.xlu0 %698
      %700 = vrot.lane.b32.xlu0 %v468, 20
      %v701 = vpop.permute.xlu0 %700
      %702 = vrot.lane.b32.xlu0 %v471, 20
      %v703 = vpop.permute.xlu0 %702
      %704 = vrot.lane.b32.xlu0 %v473, 20
      %v705 = vpop.permute.xlu0 %704
      %706 = vrot.lane.b32.xlu0 %v476, 20
      %v707 = vpop.permute.xlu0 %706
      %708 = vrot.lane.b32.xlu0 %v478, 20
      %v709 = vpop.permute.xlu0 %708
      %710 = vrot.lane.b32.xlu0 %v481, 20
      %v711 = vpop.permute.xlu0 %710
      %712 = vrot.lane.b32.xlu0 %v483, 20
      %v713 = vpop.permute.xlu0 %712
      %714 = vrot.lane.b32.xlu0 %v486, 20
      %v715 = vpop.permute.xlu0 %714
      %716 = vrot.lane.b32.xlu0 %v488, 20
      %v717 = vpop.permute.xlu0 %716
      %718 = vrot.lane.b32.xlu0 %v679, 20
      %v719 = vpop.permute.xlu0 %718
      %720 = vrot.lane.b32.xlu0 %v681, 20
      %v721 = vpop.permute.xlu0 %720
      %744 = vrot.lane.b32.xlu0 %v267, 24
      %v745 = vpop.permute.xlu0 %744
      %746 = vrot.lane.b32.xlu0 %v268, 24
      %v747 = vpop.permute.xlu0 %746
      %748 = vrot.lane.b32.xlu0 %v270, 24
      %v749 = vpop.permute.xlu0 %748
      %750 = vrot.lane.b32.xlu0 %v271, 24
      %v751 = vpop.permute.xlu0 %750
      %752 = vrot.lane.b32.xlu0 %v273, 24
      %v753 = vpop.permute.xlu0 %752
      %754 = vrot.lane.b32.xlu0 %v274, 24
      %v755 = vpop.permute.xlu0 %754
      %756 = vrot.lane.b32.xlu0 %v276, 24
      %v757 = vpop.permute.xlu0 %756
      %758 = vrot.lane.b32.xlu0 %v277, 24
      %v759 = vpop.permute.xlu0 %758
      %760 = vrot.lane.b32.xlu0 %v279, 24
      %v761 = vpop.permute.xlu0 %760
      %762 = vrot.lane.b32.xlu0 %v280, 24
      %v763 = vpop.permute.xlu0 %762
      %764 = vrot.lane.b32.xlu0 %v282, 24
      %v765 = vpop.permute.xlu0 %764
      %766 = vrot.lane.b32.xlu0 %v283, 24
      %v767 = vpop.permute.xlu0 %766
      %768 = vrot.lane.b32.xlu0 %v285, 24
      %v769 = vpop.permute.xlu0 %768
      %770 = vrot.lane.b32.xlu0 %v286, 24
      %v771 = vpop.permute.xlu0 %770
      %772 = vrot.lane.b32.xlu0 %v288, 24
      %v773 = vpop.permute.xlu0 %772
      %774 = vrot.lane.b32.xlu0 %v289, 24
      %v775 = vpop.permute.xlu0 %774
      %776 = vrot.lane.b32.xlu0 %v291, 24
      %v777 = vpop.permute.xlu0 %776
      %778 = vrot.lane.b32.xlu0 %v292, 24
      %v779 = vpop.permute.xlu0 %778
      %780 = vrot.lane.b32.xlu0 %v294, 24
      %v781 = vpop.permute.xlu0 %780
      %782 = vrot.lane.b32.xlu0 %v295, 24
      %v783 = vpop.permute.xlu0 %782
      %v805 = vrot.slane %v294, 1
      %v806 = vrot.slane %v295, 1
      %v807 = vsel %vm327, %v805, %v806
      %v808 = vrot.slane %v296, 1
      %v809 = vsel %vm327, %v806, %v808
      %810 = vrot.lane.b32.xlu0 %v340, 28
      %v811 = vpop.permute.xlu0 %810
      %812 = vrot.lane.b32.xlu0 %v342, 28
      %v813 = vpop.permute.xlu0 %812
      %814 = vrot.lane.b32.xlu0 %v345, 28
      %v815 = vpop.permute.xlu0 %814
      %816 = vrot.lane.b32.xlu0 %v347, 28
      %v817 = vpop.permute.xlu0 %816
      %818 = vrot.lane.b32.xlu0 %v350, 28
      %v819 = vpop.permute.xlu0 %818
      %820 = vrot.lane.b32.xlu0 %v352, 28
      %v821 = vpop.permute.xlu0 %820
      %822 = vrot.lane.b32.xlu0 %v355, 28
      %v823 = vpop.permute.xlu0 %822
      %824 = vrot.lane.b32.xlu0 %v357, 28
      %v825 = vpop.permute.xlu0 %824
      %826 = vrot.lane.b32.xlu0 %v360, 28
      %v827 = vpop.permute.xlu0 %826
      %828 = vrot.lane.b32.xlu0 %v362, 28
      %v829 = vpop.permute.xlu0 %828
      %830 = vrot.lane.b32.xlu0 %v365, 28
      %v831 = vpop.permute.xlu0 %830
      %832 = vrot.lane.b32.xlu0 %v367, 28
      %v833 = vpop.permute.xlu0 %832
      %834 = vrot.lane.b32.xlu0 %v370, 28
      %v835 = vpop.permute.xlu0 %834
      %836 = vrot.lane.b32.xlu0 %v372, 28
      %v837 = vpop.permute.xlu0 %836
      %838 = vrot.lane.b32.xlu0 %v375, 28
      %v839 = vpop.permute.xlu0 %838
      %840 = vrot.lane.b32.xlu0 %v377, 28
      %v841 = vpop.permute.xlu0 %840
      %842 = vrot.lane.b32.xlu0 %v614, 28
      %v843 = vpop.permute.xlu0 %842
      %844 = vrot.lane.b32.xlu0 %v616, 28
      %v845 = vpop.permute.xlu0 %844
      %846 = vrot.lane.b32.xlu0 %v807, 28
      %v847 = vpop.permute.xlu0 %846
      %848 = vrot.lane.b32.xlu0 %v809, 28
      %v849 = vpop.permute.xlu0 %848
      %v870 = vrot.slane %v294, 2
      %v871 = vrot.slane %v295, 2
      %v872 = vsel %vm438, %v870, %v871
      %v873 = vrot.slane %v296, 2
      %v874 = vsel %vm438, %v871, %v873
      %875 = vrot.lane.b32.xlu0 %v451, 32
      %v876 = vpop.permute.xlu0 %875
      %877 = vrot.lane.b32.xlu0 %v453, 32
      %v878 = vpop.permute.xlu0 %877
      %879 = vrot.lane.b32.xlu0 %v456, 32
      %v880 = vpop.permute.xlu0 %879
      %881 = vrot.lane.b32.xlu0 %v458, 32
      %v882 = vpop.permute.xlu0 %881
      %883 = vrot.lane.b32.xlu0 %v461, 32
      %v884 = vpop.permute.xlu0 %883
      %885 = vrot.lane.b32.xlu0 %v463, 32
      %v886 = vpop.permute.xlu0 %885
      %887 = vrot.lane.b32.xlu0 %v466, 32
      %v888 = vpop.permute.xlu0 %887
      %889 = vrot.lane.b32.xlu0 %v468, 32
      %v890 = vpop.permute.xlu0 %889
      %891 = vrot.lane.b32.xlu0 %v471, 32
      %v892 = vpop.permute.xlu0 %891
      %893 = vrot.lane.b32.xlu0 %v473, 32
      %v894 = vpop.permute.xlu0 %893
      %895 = vrot.lane.b32.xlu0 %v476, 32
      %v896 = vpop.permute.xlu0 %895
      %897 = vrot.lane.b32.xlu0 %v478, 32
      %v898 = vpop.permute.xlu0 %897
      %899 = vrot.lane.b32.xlu0 %v481, 32
      %v900 = vpop.permute.xlu0 %899
      %901 = vrot.lane.b32.xlu0 %v483, 32
      %v902 = vpop.permute.xlu0 %901
      %903 = vrot.lane.b32.xlu0 %v486, 32
      %v904 = vpop.permute.xlu0 %903
      %905 = vrot.lane.b32.xlu0 %v488, 32
      %v906 = vpop.permute.xlu0 %905
      %907 = vrot.lane.b32.xlu0 %v679, 32
      %v908 = vpop.permute.xlu0 %907
      %909 = vrot.lane.b32.xlu0 %v681, 32
      %v910 = vpop.permute.xlu0 %909
      %911 = vrot.lane.b32.xlu0 %v872, 32
      %v912 = vpop.permute.xlu0 %911
      %913 = vrot.lane.b32.xlu0 %v874, 32
      %v914 = vpop.permute.xlu0 %913
      %vm935 = vcmask 31744
      %v936 = vsel %vm935, %v261, %v379
      %v937 = vsel %vm935, %v262, %v381
      %v938 = vsel %vm935, %v264, %v383
      %v939 = vsel %vm935, %v265, %v385
      %v940 = vsel %vm935, %v267, %v387
      %v941 = vsel %vm935, %v268, %v389
      %v942 = vsel %vm935, %v270, %v391
      %v943 = vsel %vm935, %v271, %v393
      %v944 = vsel %vm935, %v273, %v395
      %v945 = vsel %vm935, %v274, %v397
      %v946 = vsel %vm935, %v276, %v399
      %v947 = vsel %vm935, %v277, %v401
      %v948 = vsel %vm935, %v279, %v403
      %v949 = vsel %vm935, %v280, %v405
      %v950 = vsel %vm935, %v282, %v407
      %v951 = vsel %vm935, %v283, %v409
      %v952 = vsel %vm935, %v285, %v411
      %v953 = vsel %vm935, %v286, %v413
      %v954 = vsel %vm935, %v288, %v415
      %v955 = vsel %vm935, %v289, %v417
      %vm956 = vcmask 64512
      %v957 = vsel %vm956, %v936, %v490
      %v958 = vsel %vm956, %v937, %v492
      %v959 = vsel %vm956, %v938, %v494
      %v960 = vsel %vm956, %v939, %v496
      %v961 = vsel %vm956, %v940, %v498
      %v962 = vsel %vm956, %v941, %v500
      %v963 = vsel %vm956, %v942, %v502
      %v964 = vsel %vm956, %v943, %v504
      %v965 = vsel %vm956, %v944, %v506
      %v966 = vsel %vm956, %v945, %v508
      %v967 = vsel %vm956, %v946, %v510
      %v968 = vsel %vm956, %v947, %v512
      %v969 = vsel %vm956, %v948, %v514
      %v970 = vsel %vm956, %v949, %v516
      %v971 = vsel %vm956, %v950, %v518
      %v972 = vsel %vm956, %v951, %v520
      %v973 = vsel %vm956, %v952, %v522
      %v974 = vsel %vm956, %v953, %v524
      %v975 = vsel %vm956, %v954, %v526
      %v976 = vsel %vm956, %v955, %v528
      %vm977 = vcmask 97280
      %v978 = vsel %vm977, %v957, %v552
      %v979 = vsel %vm977, %v958, %v554
      %v980 = vsel %vm977, %v959, %v556
      %v981 = vsel %vm977, %v960, %v558
      %v982 = vsel %vm977, %v961, %v560
      %v983 = vsel %vm977, %v962, %v562
      %v984 = vsel %vm977, %v963, %v564
      %v985 = vsel %vm977, %v964, %v566
      %v986 = vsel %vm977, %v965, %v568
      %v987 = vsel %vm977, %v966, %v570
      %v988 = vsel %vm977, %v967, %v572
      %v989 = vsel %vm977, %v968, %v574
      %v990 = vsel %vm977, %v969, %v576
      %v991 = vsel %vm977, %v970, %v578
      %v992 = vsel %vm977, %v971, %v580
      %v993 = vsel %vm977, %v972, %v582
      %v994 = vsel %vm977, %v973, %v584
      %v995 = vsel %vm977, %v974, %v586
      %v996 = vsel %vm977, %v975, %v588
      %v997 = vsel %vm977, %v976, %v590
      %vm998 = vcmask 130048
      %v999 = vsel %vm998, %v978, %v618
      %v1000 = vsel %vm998, %v979, %v620
      %v1001 = vsel %vm998, %v980, %v622
      %v1002 = vsel %vm998, %v981, %v624
      %v1003 = vsel %vm998, %v982, %v626
      %v1004 = vsel %vm998, %v983, %v628
      %v1005 = vsel %vm998, %v984, %v630
      %v1006 = vsel %vm998, %v985, %v632
      %v1007 = vsel %vm998, %v986, %v634
      %v1008 = vsel %vm998, %v987, %v636
      %v1009 = vsel %vm998, %v988, %v638
      %v1010 = vsel %vm998, %v989, %v640
      %v1011 = vsel %vm998, %v990, %v642
      %v1012 = vsel %vm998, %v991, %v644
      %v1013 = vsel %vm998, %v992, %v646
      %v1014 = vsel %vm998, %v993, %v648
      %v1015 = vsel %vm998, %v994, %v650
      %v1016 = vsel %vm998, %v995, %v652
      %v1017 = vsel %vm998, %v996, %v654
      %v1018 = vsel %vm998, %v997, %v656
      %vm1019 = vcmask 162816
      %v1020 = vsel %vm1019, %v999, %v683
      %v1021 = vsel %vm1019, %v1000, %v685
      %v1022 = vsel %vm1019, %v1001, %v687
      %v1023 = vsel %vm1019, %v1002, %v689
      %v1024 = vsel %vm1019, %v1003, %v691
      %v1025 = vsel %vm1019, %v1004, %v693
      %v1026 = vsel %vm1019, %v1005, %v695
      %v1027 = vsel %vm1019, %v1006, %v697
      %v1028 = vsel %vm1019, %v1007, %v699
      %v1029 = vsel %vm1019, %v1008, %v701
      %v1030 = vsel %vm1019, %v1009, %v703
      %v1031 = vsel %vm1019, %v1010, %v705
      %v1032 = vsel %vm1019, %v1011, %v707
      %v1033 = vsel %vm1019, %v1012, %v709
      %v1034 = vsel %vm1019, %v1013, %v711
      %v1035 = vsel %vm1019, %v1014, %v713
      %v1036 = vsel %vm1019, %v1015, %v715
      %v1037 = vsel %vm1019, %v1016, %v717
      %v1038 = vsel %vm1019, %v1017, %v719
      %v1039 = vsel %vm1019, %v1018, %v721
      %vm1040 = vcmask 195584
      %v1041 = vsel %vm1040, %v1020, %v745
      %v1042 = vsel %vm1040, %v1021, %v747
      %v1043 = vsel %vm1040, %v1022, %v749
      %v1044 = vsel %vm1040, %v1023, %v751
      %v1045 = vsel %vm1040, %v1024, %v753
      %v1046 = vsel %vm1040, %v1025, %v755
      %v1047 = vsel %vm1040, %v1026, %v757
      %v1048 = vsel %vm1040, %v1027, %v759
      %v1049 = vsel %vm1040, %v1028, %v761
      %v1050 = vsel %vm1040, %v1029, %v763
      %v1051 = vsel %vm1040, %v1030, %v765
      %v1052 = vsel %vm1040, %v1031, %v767
      %v1053 = vsel %vm1040, %v1032, %v769
      %v1054 = vsel %vm1040, %v1033, %v771
      %v1055 = vsel %vm1040, %v1034, %v773
      %v1056 = vsel %vm1040, %v1035, %v775
      %v1057 = vsel %vm1040, %v1036, %v777
      %v1058 = vsel %vm1040, %v1037, %v779
      %v1059 = vsel %vm1040, %v1038, %v781
      %v1060 = vsel %vm1040, %v1039, %v783
      %vm1061 = vcmask 228352
      %v1062 = vsel %vm1061, %v1041, %v811
      %v1063 = vsel %vm1061, %v1042, %v813
      %v1064 = vsel %vm1061, %v1043, %v815
      %v1065 = vsel %vm1061, %v1044, %v817
      %v1066 = vsel %vm1061, %v1045, %v819
      %v1067 = vsel %vm1061, %v1046, %v821
      %v1068 = vsel %vm1061, %v1047, %v823
      %v1069 = vsel %vm1061, %v1048, %v825
      %v1070 = vsel %vm1061, %v1049, %v827
      %v1071 = vsel %vm1061, %v1050, %v829
      %v1072 = vsel %vm1061, %v1051, %v831
      %v1073 = vsel %vm1061, %v1052, %v833
      %v1074 = vsel %vm1061, %v1053, %v835
      %v1075 = vsel %vm1061, %v1054, %v837
      %v1076 = vsel %vm1061, %v1055, %v839
      %v1077 = vsel %vm1061, %v1056, %v841
      %v1078 = vsel %vm1061, %v1057, %v843
      %v1079 = vsel %vm1061, %v1058, %v845
      %v1080 = vsel %vm1061, %v1059, %v847
      %v1081 = vsel %vm1061, %v1060, %v849
      %vm1082 = vcmask 261120
      %v1083 = vsel %vm1082, %v1062, %v876
      %v1084 = vsel %vm1082, %v1063, %v878
      %v1085 = vsel %vm1082, %v1064, %v880
      %v1086 = vsel %vm1082, %v1065, %v882
      %v1087 = vsel %vm1082, %v1066, %v884
      %v1088 = vsel %vm1082, %v1067, %v886
      %v1089 = vsel %vm1082, %v1068, %v888
      %v1090 = vsel %vm1082, %v1069, %v890
      %v1091 = vsel %vm1082, %v1070, %v892
      %v1092 = vsel %vm1082, %v1071, %v894
      %v1093 = vsel %vm1082, %v1072, %v896
      %v1094 = vsel %vm1082, %v1073, %v898
      %v1095 = vsel %vm1082, %v1074, %v900
      %v1096 = vsel %vm1082, %v1075, %v902
      %v1097 = vsel %vm1082, %v1076, %v904
      %v1098 = vsel %vm1082, %v1077, %v906
      %v1099 = vsel %vm1082, %v1078, %v908
      %v1100 = vsel %vm1082, %v1079, %v910
      %v1101 = vsel %vm1082, %v1080, %v912
      %v1102 = vsel %vm1082, %v1081, %v914
      %v1103 = vld [vmem:[%s1] sm:$0xff]
      %v1104 = vld [vmem:[%s1 + $0x8] sm:$0xff]
      %v1105 = vld [vmem:[%s1 + $0x10] sm:$0xff]
      %v1106 = vld [vmem:[%s1 + $0x18] sm:$0xff]
      %v1107 = vld [vmem:[%s1 + $0x20] sm:$0xf]
      %v1108 = vld [vmem:[%s2] sm:$0x1]
      %v1110 = vlaneseq
      %v1111 = vshrl.u32 %v1110, 7
      %v1112 = vsub.s32 0, %v1111
      %v1113 = vrot.slane %v1108, %v1112
      %vm1115 = vcmask 293888
      %v1117 = vsel %vm1115, %v1083, 0
      %v1120 = vsel %vm1115, %v1084, 0
      %v1123 = vsel %vm1115, %v1085, 0
      %v1126 = vsel %vm1115, %v1086, 0
      %v1129 = vsel %vm1115, %v1087, 0
      %v1132 = vsel %vm1115, %v1088, 0
      %v1135 = vsel %vm1115, %v1089, 0
      %v1138 = vsel %vm1115, %v1090, 0
      %v1141 = vsel %vm1115, %v1091, 0
      %v1144 = vsel %vm1115, %v1092, 0
      %v1147 = vsel %vm1115, %v1093, 0
      %v1150 = vsel %vm1115, %v1094, 0
      %v1153 = vsel %vm1115, %v1095, 0
      %v1156 = vsel %vm1115, %v1096, 0
      %v1159 = vsel %vm1115, %v1097, 0
      %v1162 = vsel %vm1115, %v1098, 0
      %v1165 = vsel %vm1115, %v1099, 0
      %v1168 = vsel %vm1115, %v1100, 0
      %v1171 = vsel %vm1115, %v1101, 0
      %v1174 = vsel %vm1115, %v1102, 0
      %vm1176 = vcmask 1043456
      %v1178 = vsel %vm1176, %v1107, 0
      %1180 = vmatprep.subr.mxu0 0.0
      %1181 = vmatpush1.msra.mxu0 %v1103
      %1182 = vmatprep.subr.mxu0 0.0
      %1183 = vmatpush1.msra.mxu0 %v1104
      %1184 = vmatprep.subr.mxu0 0.0
      %1185 = vmatpush1.msra.mxu0 %v1105
      %1186 = vmatprep.subr.mxu0 0.0
      %1187 = vmatpush1.msra.mxu0 %v1106
      %1188 = vmatprep.subr.mxu0 0.0
      %1189 = vmatpush1.msra.mxu0 %v1178
      %1190 = vmatprep.subr.mxu0 0.0
      %1191 = vmatpush1.msra.mxu0 0.0
      %1192 = vmatprep.subr.mxu0 0.0
      %1193 = vmatpush1.msra.mxu0 0.0
      %1194 = vmatprep.subr.mxu0 0.0
      %1195 = vmatpush1.msra.mxu0 0.0
      %1196 = vmatprep.subr.mxu0 0.0
      %1197 = vmatpush1.msra.mxu0 0.0
      %1198 = vmatprep.subr.mxu0 0.0
      %1199 = vmatpush1.msra.mxu0 0.0
      %1200 = vmatprep.subr.mxu0 0.0
      %1201 = vmatpush1.msra.mxu0 0.0
      %1202 = vmatprep.subr.mxu0 0.0
      %1203 = vmatpush1.msra.mxu0 0.0
      %1204 = vmatprep.subr.mxu0 0.0
      %1205 = vmatpush1.msra.mxu0 0.0
      %1206 = vmatprep.subr.mxu0 0.0
      %1207 = vmatpush1.msra.mxu0 0.0
      %1208 = vmatprep.subr.mxu0 0.0
      %1209 = vmatpush1.msra.mxu0 0.0
      %1210 = vmatprep.subr.mxu0 0.0
      %1211 = vmatpush1.msra.mxu0 0.0
      %1212 = vmatprep.subr.mxu0 0.0
      %1213 = vmatpush1.msra.mxu0 0.0
      %1214 = vmatprep.subr.mxu0 0.0
      %1215 = vmatpush1.msra.mxu0 0.0
      %1216 = vmatprep.subr.mxu0 0.0
      %1217 = vmatpush1.msra.mxu0 0.0
      %1218 = vmatprep.subr.mxu0 0.0
      %1219 = vmatpush1.msra.mxu0 0.0
      %1220 = vmatprep.subr.mxu0 0.0
      %1221 = vmatpush1.msra.mxu0 0.0
      %1222 = vmatprep.subr.mxu0 0.0
      %1223 = vmatpush1.msra.mxu0 0.0
      %1224 = vmatprep.subr.mxu0 0.0
      %1225 = vmatpush1.msra.mxu0 0.0
      %1226 = vmatprep.subr.mxu0 0.0
      %1227 = vmatpush1.msra.mxu0 0.0
      %1228 = vmatprep.subr.mxu0 0.0
      %1229 = vmatpush1.msra.mxu0 0.0
      %1230 = vmatprep.subr.mxu0 0.0
      %1231 = vmatpush1.msra.mxu0 0.0
      %1232 = vmatprep.subr.mxu0 0.0
      %1233 = vmatpush1.msra.mxu0 0.0
      %1234 = vmatprep.subr.mxu0 0.0
      %1235 = vmatpush1.msra.mxu0 0.0
      %1236 = vmatprep.subr.mxu0 0.0
      %1237 = vmatpush1.msra.mxu0 0.0
      %1238 = vmatprep.subr.mxu0 0.0
      %1239 = vmatpush1.msra.mxu0 0.0
      %1240 = vmatprep.subr.mxu0 0.0
      %1241 = vmatpush1.msra.mxu0 0.0
      %1242 = vmatprep.subr.mxu0 0.0
      %1243 = vmatpush1.msra.mxu0 0.0
      %1244 = vmatprep.mubr.f32.mxu0 0.0
      %1245 = vmatmul.mubr.f32.gmra.mrb[0].mxu0 %v1117
      %v1246 = vpop.f32.mrb[0].mxu0
      %v1247 = vadd.f32 %v1113, %v1246
      %v1248 = vpop.f32.mrb[0].mxu0
      %1249 = vmatprep.mubr.f32.mxu0 0.0
      %1250 = vmatmul.mubr.f32.gmra.mrb[0].mxu0 %v1120
      %v1251 = vpop.f32.mrb[0].mxu0
      %v1252 = vadd.f32 %v1113, %v1251
      %v1253 = vpop.f32.mrb[0].mxu0
      %1254 = vmatprep.mubr.f32.mxu0 0.0
      %1255 = vmatmul.mubr.f32.gmra.mrb[0].mxu0 %v1123
      %v1256 = vpop.f32.mrb[0].mxu0
      %v1257 = vadd.f32 %v1113, %v1256
      %v1258 = vpop.f32.mrb[0].mxu0
      %1259 = vmatprep.mubr.f32.mxu0 0.0
      %1260 = vmatmul.mubr.f32.gmra.mrb[0].mxu0 %v1126
      %v1261 = vpop.f32.mrb[0].mxu0
      %v1262 = vadd.f32 %v1113, %v1261
      %v1263 = vpop.f32.mrb[0].mxu0
      %1264 = vmatprep.mubr.f32.mxu0 0.0
      %1265 = vmatmul.mubr.f32.gmra.mrb[0].mxu0 %v1129
      %v1266 = vpop.f32.mrb[0].mxu0
      %v1267 = vadd.f32 %v1113, %v1266
      %v1268 = vpop.f32.mrb[0].mxu0
      %1269 = vmatprep.mubr.f32.mxu0 0.0
      %1270 = vmatmul.mubr.f32.gmra.mrb[0].mxu0 %v1132
      %v1271 = vpop.f32.mrb[0].mxu0
      %v1272 = vadd.f32 %v1113, %v1271
      %v1273 = vpop.f32.mrb[0].mxu0
      %1274 = vmatprep.mubr.f32.mxu0 0.0
      %1275 = vmatmul.mubr.f32.gmra.mrb[0].mxu0 %v1135
      %v1276 = vpop.f32.mrb[0].mxu0
      %v1277 = vadd.f32 %v1113, %v1276
      %v1278 = vpop.f32.mrb[0].mxu0
      %1279 = vmatprep.mubr.f32.mxu0 0.0
      %1280 = vmatmul.mubr.f32.gmra.mrb[0].mxu0 %v1138
      %v1281 = vpop.f32.mrb[0].mxu0
      %v1282 = vadd.f32 %v1113, %v1281
      %v1283 = vpop.f32.mrb[0].mxu0
      %1284 = vmatprep.mubr.f32.mxu0 0.0
      %1285 = vmatmul.mubr.f32.gmra.mrb[0].mxu0 %v1141
      %v1286 = vpop.f32.mrb[0].mxu0
      %v1287 = vadd.f32 %v1113, %v1286
      %v1288 = vpop.f32.mrb[0].mxu0
      %1289 = vmatprep.mubr.f32.mxu0 0.0
      %1290 = vmatmul.mubr.f32.gmra.mrb[0].mxu0 %v1144
      %v1291 = vpop.f32.mrb[0].mxu0
      %v1292 = vadd.f32 %v1113, %v1291
      %v1293 = vpop.f32.mrb[0].mxu0
      %1294 = vmatprep.mubr.f32.mxu0 0.0
      %1295 = vmatmul.mubr.f32.gmra.mrb[0].mxu0 %v1147
      %v1296 = vpop.f32.mrb[0].mxu0
      %v1297 = vadd.f32 %v1113, %v1296
      %v1298 = vpop.f32.mrb[0].mxu0
      %1299 = vmatprep.mubr.f32.mxu0 0.0
      %1300 = vmatmul.mubr.f32.gmra.mrb[0].mxu0 %v1150
      %v1301 = vpop.f32.mrb[0].mxu0
      %v1302 = vadd.f32 %v1113, %v1301
      %v1303 = vpop.f32.mrb[0].mxu0
      %1304 = vmatprep.mubr.f32.mxu0 0.0
      %1305 = vmatmul.mubr.f32.gmra.mrb[0].mxu0 %v1153
      %v1306 = vpop.f32.mrb[0].mxu0
      %v1307 = vadd.f32 %v1113, %v1306
      %v1308 = vpop.f32.mrb[0].mxu0
      %1309 = vmatprep.mubr.f32.mxu0 0.0
      %1310 = vmatmul.mubr.f32.gmra.mrb[0].mxu0 %v1156
      %v1311 = vpop.f32.mrb[0].mxu0
      %v1312 = vadd.f32 %v1113, %v1311
      %v1313 = vpop.f32.mrb[0].mxu0
      %1314 = vmatprep.mubr.f32.mxu0 0.0
      %1315 = vmatmul.mubr.f32.gmra.mrb[0].mxu0 %v1159
      %v1316 = vpop.f32.mrb[0].mxu0
      %v1317 = vadd.f32 %v1113, %v1316
      %v1318 = vpop.f32.mrb[0].mxu0
      %1319 = vmatprep.mubr.f32.mxu0 0.0
      %1320 = vmatmul.mubr.f32.gmra.mrb[0].mxu0 %v1162
      %v1321 = vpop.f32.mrb[0].mxu0
      %v1322 = vadd.f32 %v1113, %v1321
      %v1323 = vpop.f32.mrb[0].mxu0
      %1324 = vmatprep.mubr.f32.mxu0 0.0
      %1325 = vmatmul.mubr.f32.gmra.mrb[0].mxu0 %v1165
      %v1326 = vpop.f32.mrb[0].mxu0
      %v1327 = vadd.f32 %v1113, %v1326
      %v1328 = vpop.f32.mrb[0].mxu0
      %1329 = vmatprep.mubr.f32.mxu0 0.0
      %1330 = vmatmul.mubr.f32.gmra.mrb[0].mxu0 %v1168
      %v1331 = vpop.f32.mrb[0].mxu0
      %v1332 = vadd.f32 %v1113, %v1331
      %v1333 = vpop.f32.mrb[0].mxu0
      %1334 = vmatprep.mubr.f32.mxu0 0.0
      %1335 = vmatmul.mubr.f32.gmra.mrb[0].mxu0 %v1171
      %v1336 = vpop.f32.mrb[0].mxu0
      %v1337 = vadd.f32 %v1113, %v1336
      %v1338 = vpop.f32.mrb[0].mxu0
      %1339 = vmatprep.mubr.f32.mxu0 0.0
      %1340 = vmatmul.mubr.f32.gmra.mrb[0].mxu0 %v1174
      %v1341 = vpop.f32.mrb[0].mxu0
      %v1342 = vadd.f32 %v1113, %v1341
      %v1343 = vpop.f32.mrb[0].mxu0
      %1344 = vdwg.mxu0
      %vm1345 = vcmp.gt.f32.partialorder %v1247, 0.0
      %vm1346 = vcmp.gt.f32.partialorder %v1252, 0.0
      %vm1347 = vcmp.gt.f32.partialorder %v1257, 0.0
      %vm1348 = vcmp.gt.f32.partialorder %v1262, 0.0
      %vm1349 = vcmp.gt.f32.partialorder %v1267, 0.0
      %vm1350 = vcmp.gt.f32.partialorder %v1272, 0.0
      %vm1351 = vcmp.gt.f32.partialorder %v1277, 0.0
      %vm1352 = vcmp.gt.f32.partialorder %v1282, 0.0
      %vm1353 = vcmp.gt.f32.partialorder %v1287, 0.0
      %vm1354 = vcmp.gt.f32.partialorder %v1292, 0.0
      %vm1355 = vcmp.gt.f32.partialorder %v1297, 0.0
      %vm1356 = vcmp.gt.f32.partialorder %v1302, 0.0
      %vm1357 = vcmp.gt.f32.partialorder %v1307, 0.0
      %vm1358 = vcmp.gt.f32.partialorder %v1312, 0.0
      %vm1359 = vcmp.gt.f32.partialorder %v1317, 0.0
      %vm1360 = vcmp.gt.f32.partialorder %v1322, 0.0
      %vm1361 = vcmp.gt.f32.partialorder %v1327, 0.0
      %vm1362 = vcmp.gt.f32.partialorder %v1332, 0.0
      %vm1363 = vcmp.gt.f32.partialorder %v1337, 0.0
      %vm1364 = vcmp.gt.f32.partialorder %v1342, 0.0
      %v1365 = vmul.f32 %v1247, 0.01
      %v1366 = vmul.f32 %v1252, 0.01
      %v1367 = vmul.f32 %v1257, 0.01
      %v1368 = vmul.f32 %v1262, 0.01
      %v1369 = vmul.f32 %v1267, 0.01
      %v1370 = vmul.f32 %v1272, 0.01
      %v1371 = vmul.f32 %v1277, 0.01
      %v1372 = vmul.f32 %v1282, 0.01
      %v1373 = vmul.f32 %v1287, 0.01
      %v1374 = vmul.f32 %v1292, 0.01
      %v1375 = vmul.f32 %v1297, 0.01
      %v1376 = vmul.f32 %v1302, 0.01
      %v1377 = vmul.f32 %v1307, 0.01
      %v1378 = vmul.f32 %v1312, 0.01
      %v1379 = vmul.f32 %v1317, 0.01
      %v1380 = vmul.f32 %v1322, 0.01
      %v1381 = vmul.f32 %v1327, 0.01
      %v1382 = vmul.f32 %v1332, 0.01
      %v1383 = vmul.f32 %v1337, 0.01
      %v1384 = vmul.f32 %v1342, 0.01
      %v1385 = vsel %vm1345, %v1247, %v1365
      %v1386 = vsel %vm1346, %v1252, %v1366
      %v1387 = vsel %vm1347, %v1257, %v1367
      %v1388 = vsel %vm1348, %v1262, %v1368
      %v1389 = vsel %vm1349, %v1267, %v1369
      %v1390 = vsel %vm1350, %v1272, %v1370
      %v1391 = vsel %vm1351, %v1277, %v1371
      %v1392 = vsel %vm1352, %v1282, %v1372
      %v1393 = vsel %vm1353, %v1287, %v1373
      %v1394 = vsel %vm1354, %v1292, %v1374
      %v1395 = vsel %vm1355, %v1297, %v1375
      %v1396 = vsel %vm1356, %v1302, %v1376
      %v1397 = vsel %vm1357, %v1307, %v1377
      %v1398 = vsel %vm1358, %v1312, %v1378
      %v1399 = vsel %vm1359, %v1317, %v1379
      %v1400 = vsel %vm1360, %v1322, %v1380
      %v1401 = vsel %vm1361, %v1327, %v1381
      %v1402 = vsel %vm1362, %v1332, %v1382
      %v1403 = vsel %vm1363, %v1337, %v1383
      %v1404 = vsel %vm1364, %v1342, %v1384
      %s1405 = smul.u32 %s21, 8
      %s1406 = ssub.s32 %s1405, 1
      %v1407 = vstv %s1406
      %v1408 = vadd.s32 %v1407, 1
      %v1409 = vadd.s32 %v1407, 2
      %v1410 = vadd.s32 %v1407, 3
      %v1411 = vadd.s32 %v1407, 4
      %v1412 = vadd.s32 %v1407, 5
      %v1413 = vadd.s32 %v1407, 6
      %v1414 = vadd.s32 %v1407, 7
      %v1415 = vadd.s32 %v1407, 8
      %v1416 = vadd.s32 %v1407, 9
      %vm1417 = vcmp.ge.s32.totalorder %v1407, 0
      %vm1418 = vcmp.ge.s32.totalorder %v1408, 0
      %vm1419 = vcmp.ge.s32.totalorder %v1409, 0
      %vm1420 = vcmp.ge.s32.totalorder %v1410, 0
      %vm1421 = vcmp.ge.s32.totalorder %v1411, 0
      %vm1422 = vcmp.ge.s32.totalorder %v1412, 0
      %vm1423 = vcmp.ge.s32.totalorder %v1413, 0
      %vm1424 = vcmp.ge.s32.totalorder %v1414, 0
      %vm1425 = vcmp.ge.s32.totalorder %v1415, 0
      %vm1426 = vcmp.ge.s32.totalorder %v1416, 0
      %vm1427 = vcmp.lt.s32.totalorder %v1407, 16
      %vm1428 = vcmp.lt.s32.totalorder %v1408, 16
      %vm1429 = vcmp.lt.s32.totalorder %v1409, 16
      %vm1430 = vcmp.lt.s32.totalorder %v1410, 16
      %vm1431 = vcmp.lt.s32.totalorder %v1411, 16
      %vm1432 = vcmp.lt.s32.totalorder %v1412, 16
      %vm1433 = vcmp.lt.s32.totalorder %v1413, 16
      %vm1434 = vcmp.lt.s32.totalorder %v1414, 16
      %vm1435 = vcmp.lt.s32.totalorder %v1415, 16
      %vm1436 = vcmp.lt.s32.totalorder %v1416, 16
      %vm1437 = vmand %vm1417, %vm1427
      %vm1438 = vmand %vm1418, %vm1428
      %vm1439 = vmand %vm1419, %vm1429
      %vm1440 = vmand %vm1420, %vm1430
      %vm1441 = vmand %vm1421, %vm1431
      %vm1442 = vmand %vm1422, %vm1432
      %vm1443 = vmand %vm1423, %vm1433
      %vm1444 = vmand %vm1424, %vm1434
      %vm1445 = vmand %vm1425, %vm1435
      %vm1446 = vmand %vm1426, %vm1436
      %v1447 = vsel %vm1437, %v1385, 0.0
      %v1448 = vsel %vm1437, %v1386, 0.0
      %v1449 = vsel %vm1438, %v1387, 0.0
      %v1450 = vsel %vm1438, %v1388, 0.0
      %v1451 = vsel %vm1439, %v1389, 0.0
      %v1452 = vsel %vm1439, %v1390, 0.0
      %v1453 = vsel %vm1440, %v1391, 0.0
      %v1454 = vsel %vm1440, %v1392, 0.0
      %v1455 = vsel %vm1441, %v1393, 0.0
      %v1456 = vsel %vm1441, %v1394, 0.0
      %v1457 = vsel %vm1442, %v1395, 0.0
      %v1458 = vsel %vm1442, %v1396, 0.0
      %v1459 = vsel %vm1443, %v1397, 0.0
      %v1460 = vsel %vm1443, %v1398, 0.0
      %v1461 = vsel %vm1444, %v1399, 0.0
      %v1462 = vsel %vm1444, %v1400, 0.0
      %v1463 = vsel %vm1445, %v1401, 0.0
      %v1464 = vsel %vm1445, %v1402, 0.0
      %v1465 = vsel %vm1446, %v1403, 0.0
      %v1466 = vsel %vm1446, %v1404, 0.0
      %vm1487 = vcmask 1040384
      %v1488 = vrot.slane %v1447, 7
      %v1489 = vrot.slane %v1448, 7
      %v1490 = vsel %vm1487, %v1488, %v1489
      %v1491 = vrot.slane %v1449, 7
      %v1492 = vrot.slane %v1450, 7
      %v1493 = vsel %vm1487, %v1491, %v1492
      %v1494 = vrot.slane %v1451, 7
      %v1495 = vrot.slane %v1452, 7
      %v1496 = vsel %vm1487, %v1494, %v1495
      %v1497 = vrot.slane %v1453, 7
      %v1498 = vrot.slane %v1454, 7
      %v1499 = vsel %vm1487, %v1497, %v1498
      %v1500 = vrot.slane %v1455, 7
      %v1501 = vrot.slane %v1456, 7
      %v1502 = vsel %vm1487, %v1500, %v1501
      %v1503 = vrot.slane %v1457, 7
      %v1504 = vrot.slane %v1458, 7
      %v1505 = vsel %vm1487, %v1503, %v1504
      %v1506 = vrot.slane %v1459, 7
      %v1507 = vrot.slane %v1460, 7
      %v1508 = vsel %vm1487, %v1506, %v1507
      %v1509 = vrot.slane %v1461, 7
      %v1510 = vrot.slane %v1462, 7
      %v1511 = vsel %vm1487, %v1509, %v1510
      %v1512 = vrot.slane %v1463, 7
      %v1513 = vrot.slane %v1464, 7
      %v1514 = vsel %vm1487, %v1512, %v1513
      %v1515 = vrot.slane %v1465, 7
      %v1516 = vrot.slane %v1466, 7
      %v1517 = vsel %vm1487, %v1515, %v1516
      %v1546 = vsel %vm1487, 0.0, %v1488
      %v1547 = vsel %vm1487, 0.0, %v1491
      %v1548 = vsel %vm1487, 0.0, %v1494
      %v1549 = vsel %vm1487, 0.0, %v1497
      %v1550 = vsel %vm1487, 0.0, %v1500
      %v1551 = vsel %vm1487, 0.0, %v1503
      %v1552 = vsel %vm1487, 0.0, %v1506
      %v1553 = vsel %vm1487, 0.0, %v1509
      %v1554 = vsel %vm1487, 0.0, %v1512
      %v1555 = vsel %vm1487, 0.0, %v1515
      %v1556 = vsel %vm1487, %v1489, 0.0
      %v1557 = vsel %vm1487, %v1492, 0.0
      %v1558 = vsel %vm1487, %v1495, 0.0
      %v1559 = vsel %vm1487, %v1498, 0.0
      %v1560 = vsel %vm1487, %v1501, 0.0
      %v1561 = vsel %vm1487, %v1504, 0.0
      %v1562 = vsel %vm1487, %v1507, 0.0
      %v1563 = vsel %vm1487, %v1510, 0.0
      %v1564 = vsel %vm1487, %v1513, 0.0
      %v1565 = vsel %vm1487, %v1516, 0.0
      %v1582 = vrot.slane %v1546, 1
      %v1583 = vrot.slane %v1490, 1
      %v1584 = vsel %vm327, %v1582, %v1583
      %v1585 = vrot.slane %v1556, 1
      %v1586 = vsel %vm327, %v1583, %v1585
      %v1587 = vrot.slane %v1547, 1
      %v1588 = vrot.slane %v1493, 1
      %v1589 = vsel %vm327, %v1587, %v1588
      %v1590 = vrot.slane %v1557, 1
      %v1591 = vsel %vm327, %v1588, %v1590
      %v1592 = vrot.slane %v1548, 1
      %v1593 = vrot.slane %v1496, 1
      %v1594 = vsel %vm327, %v1592, %v1593
      %v1595 = vrot.slane %v1558, 1
      %v1596 = vsel %vm327, %v1593, %v1595
      %v1597 = vrot.slane %v1549, 1
      %v1598 = vrot.slane %v1499, 1
      %v1599 = vsel %vm327, %v1597, %v1598
      %v1600 = vrot.slane %v1559, 1
      %v1601 = vsel %vm327, %v1598, %v1600
      %v1602 = vrot.slane %v1550, 1
      %v1603 = vrot.slane %v1502, 1
      %v1604 = vsel %vm327, %v1602, %v1603
      %v1605 = vrot.slane %v1560, 1
      %v1606 = vsel %vm327, %v1603, %v1605
      %v1607 = vrot.slane %v1551, 1
      %v1608 = vrot.slane %v1505, 1
      %v1609 = vsel %vm327, %v1607, %v1608
      %v1610 = vrot.slane %v1561, 1
      %v1611 = vsel %vm327, %v1608, %v1610
      %v1612 = vrot.slane %v1552, 1
      %v1613 = vrot.slane %v1508, 1
      %v1614 = vsel %vm327, %v1612, %v1613
      %v1615 = vrot.slane %v1562, 1
      %v1616 = vsel %vm327, %v1613, %v1615
      %v1617 = vrot.slane %v1553, 1
      %v1618 = vrot.slane %v1511, 1
      %v1619 = vsel %vm327, %v1617, %v1618
      %v1620 = vrot.slane %v1563, 1
      %v1621 = vsel %vm327, %v1618, %v1620
      %1622 = vrot.lane.b32.xlu0 %v1584, 8
      %v1623 = vpop.permute.xlu0 %1622
      %1624 = vrot.lane.b32.xlu0 %v1586, 8
      %v1625 = vpop.permute.xlu0 %1624
      %1626 = vrot.lane.b32.xlu0 %v1589, 8
      %v1627 = vpop.permute.xlu0 %1626
      %1628 = vrot.lane.b32.xlu0 %v1591, 8
      %v1629 = vpop.permute.xlu0 %1628
      %1630 = vrot.lane.b32.xlu0 %v1594, 8
      %v1631 = vpop.permute.xlu0 %1630
      %1632 = vrot.lane.b32.xlu0 %v1596, 8
      %v1633 = vpop.permute.xlu0 %1632
      %1634 = vrot.lane.b32.xlu0 %v1599, 8
      %v1635 = vpop.permute.xlu0 %1634
      %1636 = vrot.lane.b32.xlu0 %v1601, 8
      %v1637 = vpop.permute.xlu0 %1636
      %1638 = vrot.lane.b32.xlu0 %v1604, 8
      %v1639 = vpop.permute.xlu0 %1638
      %1640 = vrot.lane.b32.xlu0 %v1606, 8
      %v1641 = vpop.permute.xlu0 %1640
      %1642 = vrot.lane.b32.xlu0 %v1609, 8
      %v1643 = vpop.permute.xlu0 %1642
      %1644 = vrot.lane.b32.xlu0 %v1611, 8
      %v1645 = vpop.permute.xlu0 %1644
      %1646 = vrot.lane.b32.xlu0 %v1614, 8
      %v1647 = vpop.permute.xlu0 %1646
      %1648 = vrot.lane.b32.xlu0 %v1616, 8
      %v1649 = vpop.permute.xlu0 %1648
      %1650 = vrot.lane.b32.xlu0 %v1619, 8
      %v1651 = vpop.permute.xlu0 %1650
      %1652 = vrot.lane.b32.xlu0 %v1621, 8
      %v1653 = vpop.permute.xlu0 %1652
      %v1670 = vrot.slane %v1546, 2
      %v1671 = vrot.slane %v1490, 2
      %v1672 = vsel %vm438, %v1670, %v1671
      %v1673 = vrot.slane %v1556, 2
      %v1674 = vsel %vm438, %v1671, %v1673
      %v1675 = vrot.slane %v1547, 2
      %v1676 = vrot.slane %v1493, 2
      %v1677 = vsel %vm438, %v1675, %v1676
      %v1678 = vrot.slane %v1557, 2
      %v1679 = vsel %vm438, %v1676, %v1678
      %v1680 = vrot.slane %v1548, 2
      %v1681 = vrot.slane %v1496, 2
      %v1682 = vsel %vm438, %v1680, %v1681
      %v1683 = vrot.slane %v1558, 2
      %v1684 = vsel %vm438, %v1681, %v1683
      %v1685 = vrot.slane %v1549, 2
      %v1686 = vrot.slane %v1499, 2
      %v1687 = vsel %vm438, %v1685, %v1686
      %v1688 = vrot.slane %v1559, 2
      %v1689 = vsel %vm438, %v1686, %v1688
      %v1690 = vrot.slane %v1550, 2
      %v1691 = vrot.slane %v1502, 2
      %v1692 = vsel %vm438, %v1690, %v1691
      %v1693 = vrot.slane %v1560, 2
      %v1694 = vsel %vm438, %v1691, %v1693
      %v1695 = vrot.slane %v1551, 2
      %v1696 = vrot.slane %v1505, 2
      %v1697 = vsel %vm438, %v1695, %v1696
      %v1698 = vrot.slane %v1561, 2
      %v1699 = vsel %vm438, %v1696, %v1698
      %v1700 = vrot.slane %v1552, 2
      %v1701 = vrot.slane %v1508, 2
      %v1702 = vsel %vm438, %v1700, %v1701
      %v1703 = vrot.slane %v1562, 2
      %v1704 = vsel %vm438, %v1701, %v1703
      %v1705 = vrot.slane %v1553, 2
      %v1706 = vrot.slane %v1511, 2
      %v1707 = vsel %vm438, %v1705, %v1706
      %v1708 = vrot.slane %v1563, 2
      %v1709 = vsel %vm438, %v1706, %v1708
      %1710 = vrot.lane.b32.xlu0 %v1672, 16
      %v1711 = vpop.permute.xlu0 %1710
      %1712 = vrot.lane.b32.xlu0 %v1674, 16
      %v1713 = vpop.permute.xlu0 %1712
      %1714 = vrot.lane.b32.xlu0 %v1677, 16
      %v1715 = vpop.permute.xlu0 %1714
      %1716 = vrot.lane.b32.xlu0 %v1679, 16
      %v1717 = vpop.permute.xlu0 %1716
      %1718 = vrot.lane.b32.xlu0 %v1682, 16
      %v1719 = vpop.permute.xlu0 %1718
      %1720 = vrot.lane.b32.xlu0 %v1684, 16
      %v1721 = vpop.permute.xlu0 %1720
      %1722 = vrot.lane.b32.xlu0 %v1687, 16
      %v1723 = vpop.permute.xlu0 %1722
      %1724 = vrot.lane.b32.xlu0 %v1689, 16
      %v1725 = vpop.permute.xlu0 %1724
      %1726 = vrot.lane.b32.xlu0 %v1692, 16
      %v1727 = vpop.permute.xlu0 %1726
      %1728 = vrot.lane.b32.xlu0 %v1694, 16
      %v1729 = vpop.permute.xlu0 %1728
      %1730 = vrot.lane.b32.xlu0 %v1697, 16
      %v1731 = vpop.permute.xlu0 %1730
      %1732 = vrot.lane.b32.xlu0 %v1699, 16
      %v1733 = vpop.permute.xlu0 %1732
      %1734 = vrot.lane.b32.xlu0 %v1702, 16
      %v1735 = vpop.permute.xlu0 %1734
      %1736 = vrot.lane.b32.xlu0 %v1704, 16
      %v1737 = vpop.permute.xlu0 %1736
      %1738 = vrot.lane.b32.xlu0 %v1707, 16
      %v1739 = vpop.permute.xlu0 %1738
      %1740 = vrot.lane.b32.xlu0 %v1709, 16
      %v1741 = vpop.permute.xlu0 %1740
      %1759 = vrot.lane.b32.xlu0 %v1547, 24
      %v1760 = vpop.permute.xlu0 %1759
      %1761 = vrot.lane.b32.xlu0 %v1493, 24
      %v1762 = vpop.permute.xlu0 %1761
      %1763 = vrot.lane.b32.xlu0 %v1548, 24
      %v1764 = vpop.permute.xlu0 %1763
      %1765 = vrot.lane.b32.xlu0 %v1496, 24
      %v1766 = vpop.permute.xlu0 %1765
      %1767 = vrot.lane.b32.xlu0 %v1549, 24
      %v1768 = vpop.permute.xlu0 %1767
      %1769 = vrot.lane.b32.xlu0 %v1499, 24
      %v1770 = vpop.permute.xlu0 %1769
      %1771 = vrot.lane.b32.xlu0 %v1550, 24
      %v1772 = vpop.permute.xlu0 %1771
      %1773 = vrot.lane.b32.xlu0 %v1502, 24
      %v1774 = vpop.permute.xlu0 %1773
      %1775 = vrot.lane.b32.xlu0 %v1551, 24
      %v1776 = vpop.permute.xlu0 %1775
      %1777 = vrot.lane.b32.xlu0 %v1505, 24
      %v1778 = vpop.permute.xlu0 %1777
      %1779 = vrot.lane.b32.xlu0 %v1552, 24
      %v1780 = vpop.permute.xlu0 %1779
      %1781 = vrot.lane.b32.xlu0 %v1508, 24
      %v1782 = vpop.permute.xlu0 %1781
      %1783 = vrot.lane.b32.xlu0 %v1553, 24
      %v1784 = vpop.permute.xlu0 %1783
      %1785 = vrot.lane.b32.xlu0 %v1511, 24
      %v1786 = vpop.permute.xlu0 %1785
      %1787 = vrot.lane.b32.xlu0 %v1554, 24
      %v1788 = vpop.permute.xlu0 %1787
      %1789 = vrot.lane.b32.xlu0 %v1514, 24
      %v1790 = vpop.permute.xlu0 %1789
      %v1808 = vrot.slane %v1554, 1
      %v1809 = vrot.slane %v1514, 1
      %v1810 = vsel %vm327, %v1808, %v1809
      %v1811 = vrot.slane %v1564, 1
      %v1812 = vsel %vm327, %v1809, %v1811
      %1813 = vrot.lane.b32.xlu0 %v1589, 32
      %v1814 = vpop.permute.xlu0 %1813
      %1815 = vrot.lane.b32.xlu0 %v1591, 32
      %v1816 = vpop.permute.xlu0 %1815
      %1817 = vrot.lane.b32.xlu0 %v1594, 32
      %v1818 = vpop.permute.xlu0 %1817
      %1819 = vrot.lane.b32.xlu0 %v1596, 32
      %v1820 = vpop.permute.xlu0 %1819
      %1821 = vrot.lane.b32.xlu0 %v1599, 32
      %v1822 = vpop.permute.xlu0 %1821
      %1823 = vrot.lane.b32.xlu0 %v1601, 32
      %v1824 = vpop.permute.xlu0 %1823
      %1825 = vrot.lane.b32.xlu0 %v1604, 32
      %v1826 = vpop.permute.xlu0 %1825
      %1827 = vrot.lane.b32.xlu0 %v1606, 32
      %v1828 = vpop.permute.xlu0 %1827
      %1829 = vrot.lane.b32.xlu0 %v1609, 32
      %v1830 = vpop.permute.xlu0 %1829
      %1831 = vrot.lane.b32.xlu0 %v1611, 32
      %v1832 = vpop.permute.xlu0 %1831
      %1833 = vrot.lane.b32.xlu0 %v1614, 32
      %v1834 = vpop.permute.xlu0 %1833
      %1835 = vrot.lane.b32.xlu0 %v1616, 32
      %v1836 = vpop.permute.xlu0 %1835
      %1837 = vrot.lane.b32.xlu0 %v1619, 32
      %v1838 = vpop.permute.xlu0 %1837
      %1839 = vrot.lane.b32.xlu0 %v1621, 32
      %v1840 = vpop.permute.xlu0 %1839
      %1841 = vrot.lane.b32.xlu0 %v1810, 32
      %v1842 = vpop.permute.xlu0 %1841
      %1843 = vrot.lane.b32.xlu0 %v1812, 32
      %v1844 = vpop.permute.xlu0 %1843
      %v1861 = vrot.slane %v1554, 2
      %v1862 = vrot.slane %v1514, 2
      %v1863 = vsel %vm438, %v1861, %v1862
      %v1864 = vrot.slane %v1564, 2
      %v1865 = vsel %vm438, %v1862, %v1864
      %1866 = vrot.lane.b32.xlu0 %v1677, 40
      %v1867 = vpop.permute.xlu0 %1866
      %1868 = vrot.lane.b32.xlu0 %v1679, 40
      %v1869 = vpop.permute.xlu0 %1868
      %1870 = vrot.lane.b32.xlu0 %v1682, 40
      %v1871 = vpop.permute.xlu0 %1870
      %1872 = vrot.lane.b32.xlu0 %v1684, 40
      %v1873 = vpop.permute.xlu0 %1872
      %1874 = vrot.lane.b32.xlu0 %v1687, 40
      %v1875 = vpop.permute.xlu0 %1874
      %1876 = vrot.lane.b32.xlu0 %v1689, 40
      %v1877 = vpop.permute.xlu0 %1876
      %1878 = vrot.lane.b32.xlu0 %v1692, 40
      %v1879 = vpop.permute.xlu0 %1878
      %1880 = vrot.lane.b32.xlu0 %v1694, 40
      %v1881 = vpop.permute.xlu0 %1880
      %1882 = vrot.lane.b32.xlu0 %v1697, 40
      %v1883 = vpop.permute.xlu0 %1882
      %1884 = vrot.lane.b32.xlu0 %v1699, 40
      %v1885 = vpop.permute.xlu0 %1884
      %1886 = vrot.lane.b32.xlu0 %v1702, 40
      %v1887 = vpop.permute.xlu0 %1886
      %1888 = vrot.lane.b32.xlu0 %v1704, 40
      %v1889 = vpop.permute.xlu0 %1888
      %1890 = vrot.lane.b32.xlu0 %v1707, 40
      %v1891 = vpop.permute.xlu0 %1890
      %1892 = vrot.lane.b32.xlu0 %v1709, 40
      %v1893 = vpop.permute.xlu0 %1892
      %1894 = vrot.lane.b32.xlu0 %v1863, 40
      %v1895 = vpop.permute.xlu0 %1894
      %1896 = vrot.lane.b32.xlu0 %v1865, 40
      %v1897 = vpop.permute.xlu0 %1896
      %1915 = vrot.lane.b32.xlu0 %v1548, 48
      %v1916 = vpop.permute.xlu0 %1915
      %1917 = vrot.lane.b32.xlu0 %v1496, 48
      %v1918 = vpop.permute.xlu0 %1917
      %1919 = vrot.lane.b32.xlu0 %v1549, 48
      %v1920 = vpop.permute.xlu0 %1919
      %1921 = vrot.lane.b32.xlu0 %v1499, 48
      %v1922 = vpop.permute.xlu0 %1921
      %1923 = vrot.lane.b32.xlu0 %v1550, 48
      %v1924 = vpop.permute.xlu0 %1923
      %1925 = vrot.lane.b32.xlu0 %v1502, 48
      %v1926 = vpop.permute.xlu0 %1925
      %1927 = vrot.lane.b32.xlu0 %v1551, 48
      %v1928 = vpop.permute.xlu0 %1927
      %1929 = vrot.lane.b32.xlu0 %v1505, 48
      %v1930 = vpop.permute.xlu0 %1929
      %1931 = vrot.lane.b32.xlu0 %v1552, 48
      %v1932 = vpop.permute.xlu0 %1931
      %1933 = vrot.lane.b32.xlu0 %v1508, 48
      %v1934 = vpop.permute.xlu0 %1933
      %1935 = vrot.lane.b32.xlu0 %v1553, 48
      %v1936 = vpop.permute.xlu0 %1935
      %1937 = vrot.lane.b32.xlu0 %v1511, 48
      %v1938 = vpop.permute.xlu0 %1937
      %1939 = vrot.lane.b32.xlu0 %v1554, 48
      %v1940 = vpop.permute.xlu0 %1939
      %1941 = vrot.lane.b32.xlu0 %v1514, 48
      %v1942 = vpop.permute.xlu0 %1941
      %1943 = vrot.lane.b32.xlu0 %v1555, 48
      %v1944 = vpop.permute.xlu0 %1943
      %1945 = vrot.lane.b32.xlu0 %v1517, 48
      %v1946 = vpop.permute.xlu0 %1945
      %v1964 = vrot.slane %v1555, 1
      %v1965 = vrot.slane %v1517, 1
      %v1966 = vsel %vm327, %v1964, %v1965
      %v1967 = vrot.slane %v1565, 1
      %v1968 = vsel %vm327, %v1965, %v1967
      %1969 = vrot.lane.b32.xlu0 %v1594, 56
      %v1970 = vpop.permute.xlu0 %1969
      %1971 = vrot.lane.b32.xlu0 %v1596, 56
      %v1972 = vpop.permute.xlu0 %1971
      %1973 = vrot.lane.b32.xlu0 %v1599, 56
      %v1974 = vpop.permute.xlu0 %1973
      %1975 = vrot.lane.b32.xlu0 %v1601, 56
      %v1976 = vpop.permute.xlu0 %1975
      %1977 = vrot.lane.b32.xlu0 %v1604, 56
      %v1978 = vpop.permute.xlu0 %1977
      %1979 = vrot.lane.b32.xlu0 %v1606, 56
      %v1980 = vpop.permute.xlu0 %1979
      %1981 = vrot.lane.b32.xlu0 %v1609, 56
      %v1982 = vpop.permute.xlu0 %1981
      %1983 = vrot.lane.b32.xlu0 %v1611, 56
      %v1984 = vpop.permute.xlu0 %1983
      %1985 = vrot.lane.b32.xlu0 %v1614, 56
      %v1986 = vpop.permute.xlu0 %1985
      %1987 = vrot.lane.b32.xlu0 %v1616, 56
      %v1988 = vpop.permute.xlu0 %1987
      %1989 = vrot.lane.b32.xlu0 %v1619, 56
      %v1990 = vpop.permute.xlu0 %1989
      %1991 = vrot.lane.b32.xlu0 %v1621, 56
      %v1992 = vpop.permute.xlu0 %1991
      %1993 = vrot.lane.b32.xlu0 %v1810, 56
      %v1994 = vpop.permute.xlu0 %1993
      %1995 = vrot.lane.b32.xlu0 %v1812, 56
      %v1996 = vpop.permute.xlu0 %1995
      %1997 = vrot.lane.b32.xlu0 %v1966, 56
      %v1998 = vpop.permute.xlu0 %1997
      %1999 = vrot.lane.b32.xlu0 %v1968, 56
      %v2000 = vpop.permute.xlu0 %1999
      %v2017 = vrot.slane %v1555, 2
      %v2018 = vrot.slane %v1517, 2
      %v2019 = vsel %vm438, %v2017, %v2018
      %v2020 = vrot.slane %v1565, 2
      %v2021 = vsel %vm438, %v2018, %v2020
      %2022 = vrot.lane.b32.xlu0 %v1682, 64
      %v2023 = vpop.permute.xlu0 %2022
      %2024 = vrot.lane.b32.xlu0 %v1684, 64
      %v2025 = vpop.permute.xlu0 %2024
      %2026 = vrot.lane.b32.xlu0 %v1687, 64
      %v2027 = vpop.permute.xlu0 %2026
      %2028 = vrot.lane.b32.xlu0 %v1689, 64
      %v2029 = vpop.permute.xlu0 %2028
      %2030 = vrot.lane.b32.xlu0 %v1692, 64
      %v2031 = vpop.permute.xlu0 %2030
      %2032 = vrot.lane.b32.xlu0 %v1694, 64
      %v2033 = vpop.permute.xlu0 %2032
      %2034 = vrot.lane.b32.xlu0 %v1697, 64
      %v2035 = vpop.permute.xlu0 %2034
      %2036 = vrot.lane.b32.xlu0 %v1699, 64
      %v2037 = vpop.permute.xlu0 %2036
      %2038 = vrot.lane.b32.xlu0 %v1702, 64
      %v2039 = vpop.permute.xlu0 %2038
      %2040 = vrot.lane.b32.xlu0 %v1704, 64
      %v2041 = vpop.permute.xlu0 %2040
      %2042 = vrot.lane.b32.xlu0 %v1707, 64
      %v2043 = vpop.permute.xlu0 %2042
      %2044 = vrot.lane.b32.xlu0 %v1709, 64
      %v2045 = vpop.permute.xlu0 %2044
      %2046 = vrot.lane.b32.xlu0 %v1863, 64
      %v2047 = vpop.permute.xlu0 %2046
      %2048 = vrot.lane.b32.xlu0 %v1865, 64
      %v2049 = vpop.permute.xlu0 %2048
      %2050 = vrot.lane.b32.xlu0 %v2019, 64
      %v2051 = vpop.permute.xlu0 %2050
      %2052 = vrot.lane.b32.xlu0 %v2021, 64
      %v2053 = vpop.permute.xlu0 %2052
      %v2070 = vsel %vm956, %v1546, %v1623
      %v2071 = vsel %vm956, %v1490, %v1625
      %v2072 = vsel %vm956, %v1547, %v1627
      %v2073 = vsel %vm956, %v1493, %v1629
      %v2074 = vsel %vm956, %v1548, %v1631
      %v2075 = vsel %vm956, %v1496, %v1633
      %v2076 = vsel %vm956, %v1549, %v1635
      %v2077 = vsel %vm956, %v1499, %v1637
      %v2078 = vsel %vm956, %v1550, %v1639
      %v2079 = vsel %vm956, %v1502, %v1641
      %v2080 = vsel %vm956, %v1551, %v1643
      %v2081 = vsel %vm956, %v1505, %v1645
      %v2082 = vsel %vm956, %v1552, %v1647
      %v2083 = vsel %vm956, %v1508, %v1649
      %v2084 = vsel %vm956, %v1553, %v1651
      %v2085 = vsel %vm956, %v1511, %v1653
      %v2086 = vsel %vm998, %v2070, %v1711
      %v2087 = vsel %vm998, %v2071, %v1713
      %v2088 = vsel %vm998, %v2072, %v1715
      %v2089 = vsel %vm998, %v2073, %v1717
      %v2090 = vsel %vm998, %v2074, %v1719
      %v2091 = vsel %vm998, %v2075, %v1721
      %v2092 = vsel %vm998, %v2076, %v1723
      %v2093 = vsel %vm998, %v2077, %v1725
      %v2094 = vsel %vm998, %v2078, %v1727
      %v2095 = vsel %vm998, %v2079, %v1729
      %v2096 = vsel %vm998, %v2080, %v1731
      %v2097 = vsel %vm998, %v2081, %v1733
      %v2098 = vsel %vm998, %v2082, %v1735
      %v2099 = vsel %vm998, %v2083, %v1737
      %v2100 = vsel %vm998, %v2084, %v1739
      %v2101 = vsel %vm998, %v2085, %v1741
      %v2102 = vsel %vm1040, %v2086, %v1760
      %v2103 = vsel %vm1040, %v2087, %v1762
      %v2104 = vsel %vm1040, %v2088, %v1764
      %v2105 = vsel %vm1040, %v2089, %v1766
      %v2106 = vsel %vm1040, %v2090, %v1768
      %v2107 = vsel %vm1040, %v2091, %v1770
      %v2108 = vsel %vm1040, %v2092, %v1772
      %v2109 = vsel %vm1040, %v2093, %v1774
      %v2110 = vsel %vm1040, %v2094, %v1776
      %v2111 = vsel %vm1040, %v2095, %v1778
      %v2112 = vsel %vm1040, %v2096, %v1780
      %v2113 = vsel %vm1040, %v2097, %v1782
      %v2114 = vsel %vm1040, %v2098, %v1784
      %v2115 = vsel %vm1040, %v2099, %v1786
      %v2116 = vsel %vm1040, %v2100, %v1788
      %v2117 = vsel %vm1040, %v2101, %v1790
      %v2118 = vsel %vm1082, %v2102, %v1814
      %v2119 = vsel %vm1082, %v2103, %v1816
      %v2120 = vsel %vm1082, %v2104, %v1818
      %v2121 = vsel %vm1082, %v2105, %v1820
      %v2122 = vsel %vm1082, %v2106, %v1822
      %v2123 = vsel %vm1082, %v2107, %v1824
      %v2124 = vsel %vm1082, %v2108, %v1826
      %v2125 = vsel %vm1082, %v2109, %v1828
      %v2126 = vsel %vm1082, %v2110, %v1830
      %v2127 = vsel %vm1082, %v2111, %v1832
      %v2128 = vsel %vm1082, %v2112, %v1834
      %v2129 = vsel %vm1082, %v2113, %v1836
      %v2130 = vsel %vm1082, %v2114, %v1838
      %v2131 = vsel %vm1082, %v2115, %v1840
      %v2132 = vsel %vm1082, %v2116, %v1842
      %v2133 = vsel %vm1082, %v2117, %v1844
      %vm2134 = vcmask 326656
      %v2135 = vsel %vm2134, %v2118, %v1867
      %v2136 = vsel %vm2134, %v2119, %v1869
      %v2137 = vsel %vm2134, %v2120, %v1871
      %v2138 = vsel %vm2134, %v2121, %v1873
      %v2139 = vsel %vm2134, %v2122, %v1875
      %v2140 = vsel %vm2134, %v2123, %v1877
      %v2141 = vsel %vm2134, %v2124, %v1879
      %v2142 = vsel %vm2134, %v2125, %v1881
      %v2143 = vsel %vm2134, %v2126, %v1883
      %v2144 = vsel %vm2134, %v2127, %v1885
      %v2145 = vsel %vm2134, %v2128, %v1887
      %v2146 = vsel %vm2134, %v2129, %v1889
      %v2147 = vsel %vm2134, %v2130, %v1891
      %v2148 = vsel %vm2134, %v2131, %v1893
      %v2149 = vsel %vm2134, %v2132, %v1895
      %v2150 = vsel %vm2134, %v2133, %v1897
      %vm2151 = vcmask 392192
      %v2152 = vsel %vm2151, %v2135, %v1916
      %v2153 = vsel %vm2151, %v2136, %v1918
      %v2154 = vsel %vm2151, %v2137, %v1920
      %v2155 = vsel %vm2151, %v2138, %v1922
      %v2156 = vsel %vm2151, %v2139, %v1924
      %v2157 = vsel %vm2151, %v2140, %v1926
      %v2158 = vsel %vm2151, %v2141, %v1928
      %v2159 = vsel %vm2151, %v2142, %v1930
      %v2160 = vsel %vm2151, %v2143, %v1932
      %v2161 = vsel %vm2151, %v2144, %v1934
      %v2162 = vsel %vm2151, %v2145, %v1936
      %v2163 = vsel %vm2151, %v2146, %v1938
      %v2164 = vsel %vm2151, %v2147, %v1940
      %v2165 = vsel %vm2151, %v2148, %v1942
      %v2166 = vsel %vm2151, %v2149, %v1944
      %v2167 = vsel %vm2151, %v2150, %v1946
      %vm2168 = vcmask 457728
      %v2169 = vsel %vm2168, %v2152, %v1970
      %v2170 = vsel %vm2168, %v2153, %v1972
      %v2171 = vsel %vm2168, %v2154, %v1974
      %v2172 = vsel %vm2168, %v2155, %v1976
      %v2173 = vsel %vm2168, %v2156, %v1978
      %v2174 = vsel %vm2168, %v2157, %v1980
      %v2175 = vsel %vm2168, %v2158, %v1982
      %v2176 = vsel %vm2168, %v2159, %v1984
      %v2177 = vsel %vm2168, %v2160, %v1986
      %v2178 = vsel %vm2168, %v2161, %v1988
      %v2179 = vsel %vm2168, %v2162, %v1990
      %v2180 = vsel %vm2168, %v2163, %v1992
      %v2181 = vsel %vm2168, %v2164, %v1994
      %v2182 = vsel %vm2168, %v2165, %v1996
      %v2183 = vsel %vm2168, %v2166, %v1998
      %v2184 = vsel %vm2168, %v2167, %v2000
      %vm2185 = vcmask 523264
      %v2186 = vsel %vm2185, %v2169, %v2023
      %v2187 = vsel %vm2185, %v2170, %v2025
      %v2188 = vsel %vm2185, %v2171, %v2027
      %v2189 = vsel %vm2185, %v2172, %v2029
      %v2190 = vsel %vm2185, %v2173, %v2031
      %v2191 = vsel %vm2185, %v2174, %v2033
      %v2192 = vsel %vm2185, %v2175, %v2035
      %v2193 = vsel %vm2185, %v2176, %v2037
      %v2194 = vsel %vm2185, %v2177, %v2039
      %v2195 = vsel %vm2185, %v2178, %v2041
      %v2196 = vsel %vm2185, %v2179, %v2043
      %v2197 = vsel %vm2185, %v2180, %v2045
      %v2198 = vsel %vm2185, %v2181, %v2047
      %v2199 = vsel %vm2185, %v2182, %v2049
      %v2200 = vsel %vm2185, %v2183, %v2051
      %v2201 = vsel %vm2185, %v2184, %v2053
      %v2202 = vld [vmem:[%s3] sm:$0xff]
      %v2203 = vld [vmem:[%s3 + $0x8] sm:$0xff]
      %v2204 = vld [vmem:[%s3 + $0x10] sm:$0xff]
      %v2205 = vld [vmem:[%s3 + $0x18] sm:$0xff]
      %v2206 = vld [vmem:[%s3 + $0x20] sm:$0xff]
      %v2207 = vld [vmem:[%s3 + $0x28] sm:$0xff]
      %v2208 = vld [vmem:[%s3 + $0x30] sm:$0xff]
      %v2209 = vld [vmem:[%s3 + $0x38] sm:$0xff]
      %v2210 = vld [vmem:[%s3 + $0x40] sm:$0xff]
      %v2211 = vld [vmem:[%s4] sm:$0x1]
      %v2213 = vlaneseq
      %v2214 = vshrl.u32 %v2213, 7
      %v2215 = vsub.s32 0, %v2214
      %v2216 = vrot.slane %v2211, %v2215
      %vm2218 = vcmask 588800
      %v2220 = vsel %vm2218, %v2186, 0
      %v2223 = vsel %vm2218, %v2187, 0
      %v2226 = vsel %vm2218, %v2188, 0
      %v2229 = vsel %vm2218, %v2189, 0
      %v2232 = vsel %vm2218, %v2190, 0
      %v2235 = vsel %vm2218, %v2191, 0
      %v2238 = vsel %vm2218, %v2192, 0
      %v2241 = vsel %vm2218, %v2193, 0
      %v2244 = vsel %vm2218, %v2194, 0
      %v2247 = vsel %vm2218, %v2195, 0
      %v2250 = vsel %vm2218, %v2196, 0
      %v2253 = vsel %vm2218, %v2197, 0
      %v2256 = vsel %vm2218, %v2198, 0
      %v2259 = vsel %vm2218, %v2199, 0
      %v2262 = vsel %vm2218, %v2200, 0
      %v2265 = vsel %vm2218, %v2201, 0
      %2267 = vmatprep.subr.mxu0 0.0
      %2268 = vmatpush1.msra.mxu0 %v2202
      %2269 = vmatprep.subr.mxu0 0.0
      %2270 = vmatpush1.msra.mxu0 %v2203
      %2271 = vmatprep.subr.mxu0 0.0
      %2272 = vmatpush1.msra.mxu0 %v2204
      %2273 = vmatprep.subr.mxu0 0.0
      %2274 = vmatpush1.msra.mxu0 %v2205
      %2275 = vmatprep.subr.mxu0 0.0
      %2276 = vmatpush1.msra.mxu0 %v2206
      %2277 = vmatprep.subr.mxu0 0.0
      %2278 = vmatpush1.msra.mxu0 %v2207
      %2279 = vmatprep.subr.mxu0 0.0
      %2280 = vmatpush1.msra.mxu0 %v2208
      %2281 = vmatprep.subr.mxu0 0.0
      %2282 = vmatpush1.msra.mxu0 %v2209
      %2283 = vmatprep.subr.mxu0 0.0
      %2284 = vmatpush1.msra.mxu0 %v2210
      %2285 = vmatprep.subr.mxu0 0.0
      %2286 = vmatpush1.msra.mxu0 0.0
      %2287 = vmatprep.subr.mxu0 0.0
      %2288 = vmatpush1.msra.mxu0 0.0
      %2289 = vmatprep.subr.mxu0 0.0
      %2290 = vmatpush1.msra.mxu0 0.0
      %2291 = vmatprep.subr.mxu0 0.0
      %2292 = vmatpush1.msra.mxu0 0.0
      %2293 = vmatprep.subr.mxu0 0.0
      %2294 = vmatpush1.msra.mxu0 0.0
      %2295 = vmatprep.subr.mxu0 0.0
      %2296 = vmatpush1.msra.mxu0 0.0
      %2297 = vmatprep.subr.mxu0 0.0
      %2298 = vmatpush1.msra.mxu0 0.0
      %2299 = vmatprep.subr.mxu0 0.0
      %2300 = vmatpush1.msra.mxu0 0.0
      %2301 = vmatprep.subr.mxu0 0.0
      %2302 = vmatpush1.msra.mxu0 0.0
      %2303 = vmatprep.subr.mxu0 0.0
      %2304 = vmatpush1.msra.mxu0 0.0
      %2305 = vmatprep.subr.mxu0 0.0
      %2306 = vmatpush1.msra.mxu0 0.0
      %2307 = vmatprep.subr.mxu0 0.0
      %2308 = vmatpush1.msra.mxu0 0.0
      %2309 = vmatprep.subr.mxu0 0.0
      %2310 = vmatpush1.msra.mxu0 0.0
      %2311 = vmatprep.subr.mxu0 0.0
      %2312 = vmatpush1.msra.mxu0 0.0
      %2313 = vmatprep.subr.mxu0 0.0
      %2314 = vmatpush1.msra.mxu0 0.0
      %2315 = vmatprep.subr.mxu0 0.0
      %2316 = vmatpush1.msra.mxu0 0.0
      %2317 = vmatprep.subr.mxu0 0.0
      %2318 = vmatpush1.msra.mxu0 0.0
      %2319 = vmatprep.subr.mxu0 0.0
      %2320 = vmatpush1.msra.mxu0 0.0
      %2321 = vmatprep.subr.mxu0 0.0
      %2322 = vmatpush1.msra.mxu0 0.0
      %2323 = vmatprep.subr.mxu0 0.0
      %2324 = vmatpush1.msra.mxu0 0.0
      %2325 = vmatprep.subr.mxu0 0.0
      %2326 = vmatpush1.msra.mxu0 0.0
      %2327 = vmatprep.subr.mxu0 0.0
      %2328 = vmatpush1.msra.mxu0 0.0
      %2329 = vmatprep.subr.mxu0 0.0
      %2330 = vmatpush1.msra.mxu0 0.0
      %2331 = vmatprep.mubr.f32.mxu0 0.0
      %2332 = vmatmul.mubr.f32.gmra.mrb[0].mxu0 %v2220
      %v2333 = vpop.f32.mrb[0].mxu0
      %v2334 = vadd.f32 %v2216, %v2333
      %v2335 = vpop.f32.mrb[0].mxu0
      %2336 = vmatprep.mubr.f32.mxu0 0.0
      %2337 = vmatmul.mubr.f32.gmra.mrb[0].mxu0 %v2223
      %v2338 = vpop.f32.mrb[0].mxu0
      %v2339 = vadd.f32 %v2216, %v2338
      %v2340 = vpop.f32.mrb[0].mxu0
      %2341 = vmatprep.mubr.f32.mxu0 0.0
      %2342 = vmatmul.mubr.f32.gmra.mrb[0].mxu0 %v2226
      %v2343 = vpop.f32.mrb[0].mxu0
      %v2344 = vadd.f32 %v2216, %v2343
      %v2345 = vpop.f32.mrb[0].mxu0
      %2346 = vmatprep.mubr.f32.mxu0 0.0
      %2347 = vmatmul.mubr.f32.gmra.mrb[0].mxu0 %v2229
      %v2348 = vpop.f32.mrb[0].mxu0
      %v2349 = vadd.f32 %v2216, %v2348
      %v2350 = vpop.f32.mrb[0].mxu0
      %2351 = vmatprep.mubr.f32.mxu0 0.0
      %2352 = vmatmul.mubr.f32.gmra.mrb[0].mxu0 %v2232
      %v2353 = vpop.f32.mrb[0].mxu0
      %v2354 = vadd.f32 %v2216, %v2353
      %v2355 = vpop.f32.mrb[0].mxu0
      %2356 = vmatprep.mubr.f32.mxu0 0.0
      %2357 = vmatmul.mubr.f32.gmra.mrb[0].mxu0 %v2235
      %v2358 = vpop.f32.mrb[0].mxu0
      %v2359 = vadd.f32 %v2216, %v2358
      %v2360 = vpop.f32.mrb[0].mxu0
      %2361 = vmatprep.mubr.f32.mxu0 0.0
      %2362 = vmatmul.mubr.f32.gmra.mrb[0].mxu0 %v2238
      %v2363 = vpop.f32.mrb[0].mxu0
      %v2364 = vadd.f32 %v2216, %v2363
      %v2365 = vpop.f32.mrb[0].mxu0
      %2366 = vmatprep.mubr.f32.mxu0 0.0
      %2367 = vmatmul.mubr.f32.gmra.mrb[0].mxu0 %v2241
      %v2368 = vpop.f32.mrb[0].mxu0
      %v2369 = vadd.f32 %v2216, %v2368
      %v2370 = vpop.f32.mrb[0].mxu0
      %2371 = vmatprep.mubr.f32.mxu0 0.0
      %2372 = vmatmul.mubr.f32.gmra.mrb[0].mxu0 %v2244
      %v2373 = vpop.f32.mrb[0].mxu0
      %v2374 = vadd.f32 %v2216, %v2373
      %v2375 = vpop.f32.mrb[0].mxu0
      %2376 = vmatprep.mubr.f32.mxu0 0.0
      %2377 = vmatmul.mubr.f32.gmra.mrb[0].mxu0 %v2247
      %v2378 = vpop.f32.mrb[0].mxu0
      %v2379 = vadd.f32 %v2216, %v2378
      %v2380 = vpop.f32.mrb[0].mxu0
      %2381 = vmatprep.mubr.f32.mxu0 0.0
      %2382 = vmatmul.mubr.f32.gmra.mrb[0].mxu0 %v2250
      %v2383 = vpop.f32.mrb[0].mxu0
      %v2384 = vadd.f32 %v2216, %v2383
      %v2385 = vpop.f32.mrb[0].mxu0
      %2386 = vmatprep.mubr.f32.mxu0 0.0
      %2387 = vmatmul.mubr.f32.gmra.mrb[0].mxu0 %v2253
      %v2388 = vpop.f32.mrb[0].mxu0
      %v2389 = vadd.f32 %v2216, %v2388
      %v2390 = vpop.f32.mrb[0].mxu0
      %2391 = vmatprep.mubr.f32.mxu0 0.0
      %2392 = vmatmul.mubr.f32.gmra.mrb[0].mxu0 %v2256
      %v2393 = vpop.f32.mrb[0].mxu0
      %v2394 = vadd.f32 %v2216, %v2393
      %v2395 = vpop.f32.mrb[0].mxu0
      %2396 = vmatprep.mubr.f32.mxu0 0.0
      %2397 = vmatmul.mubr.f32.gmra.mrb[0].mxu0 %v2259
      %v2398 = vpop.f32.mrb[0].mxu0
      %v2399 = vadd.f32 %v2216, %v2398
      %v2400 = vpop.f32.mrb[0].mxu0
      %2401 = vmatprep.mubr.f32.mxu0 0.0
      %2402 = vmatmul.mubr.f32.gmra.mrb[0].mxu0 %v2262
      %v2403 = vpop.f32.mrb[0].mxu0
      %v2404 = vadd.f32 %v2216, %v2403
      %v2405 = vpop.f32.mrb[0].mxu0
      %2406 = vmatprep.mubr.f32.mxu0 0.0
      %2407 = vmatmul.mubr.f32.gmra.mrb[0].mxu0 %v2265
      %v2408 = vpop.f32.mrb[0].mxu0
      %v2409 = vadd.f32 %v2216, %v2408
      %v2410 = vpop.f32.mrb[0].mxu0
      %2411 = vdwg.mxu0
      %vm2412 = vcmp.gt.f32.partialorder %v2334, 0.0
      %vm2413 = vcmp.gt.f32.partialorder %v2339, 0.0
      %vm2414 = vcmp.gt.f32.partialorder %v2344, 0.0
      %vm2415 = vcmp.gt.f32.partialorder %v2349, 0.0
      %vm2416 = vcmp.gt.f32.partialorder %v2354, 0.0
      %vm2417 = vcmp.gt.f32.partialorder %v2359, 0.0
      %vm2418 = vcmp.gt.f32.partialorder %v2364, 0.0
      %vm2419 = vcmp.gt.f32.partialorder %v2369, 0.0
      %vm2420 = vcmp.gt.f32.partialorder %v2374, 0.0
      %vm2421 = vcmp.gt.f32.partialorder %v2379, 0.0
      %vm2422 = vcmp.gt.f32.partialorder %v2384, 0.0
      %vm2423 = vcmp.gt.f32.partialorder %v2389, 0.0
      %vm2424 = vcmp.gt.f32.partialorder %v2394, 0.0
      %vm2425 = vcmp.gt.f32.partialorder %v2399, 0.0
      %vm2426 = vcmp.gt.f32.partialorder %v2404, 0.0
      %vm2427 = vcmp.gt.f32.partialorder %v2409, 0.0
      %v2428 = vmul.f32 %v2334, 0.01
      %v2429 = vmul.f32 %v2339, 0.01
      %v2430 = vmul.f32 %v2344, 0.01
      %v2431 = vmul.f32 %v2349, 0.01
      %v2432 = vmul.f32 %v2354, 0.01
      %v2433 = vmul.f32 %v2359, 0.01
      %v2434 = vmul.f32 %v2364, 0.01
      %v2435 = vmul.f32 %v2369, 0.01
      %v2436 = vmul.f32 %v2374, 0.01
      %v2437 = vmul.f32 %v2379, 0.01
      %v2438 = vmul.f32 %v2384, 0.01
      %v2439 = vmul.f32 %v2389, 0.01
      %v2440 = vmul.f32 %v2394, 0.01
      %v2441 = vmul.f32 %v2399, 0.01
      %v2442 = vmul.f32 %v2404, 0.01
      %v2443 = vmul.f32 %v2409, 0.01
      %v2444 = vsel %vm2412, %v2334, %v2428
      %v2445 = vsel %vm2413, %v2339, %v2429
      %v2446 = vsel %vm2414, %v2344, %v2430
      %v2447 = vsel %vm2415, %v2349, %v2431
      %v2448 = vsel %vm2416, %v2354, %v2432
      %v2449 = vsel %vm2417, %v2359, %v2433
      %v2450 = vsel %vm2418, %v2364, %v2434
      %v2451 = vsel %vm2419, %v2369, %v2435
      %v2452 = vsel %vm2420, %v2374, %v2436
      %v2453 = vsel %vm2421, %v2379, %v2437
      %v2454 = vsel %vm2422, %v2384, %v2438
      %v2455 = vsel %vm2423, %v2389, %v2439
      %v2456 = vsel %vm2424, %v2394, %v2440
      %v2457 = vsel %vm2425, %v2399, %v2441
      %v2458 = vsel %vm2426, %v2404, %v2442
      %v2459 = vsel %vm2427, %v2409, %v2443
      %2460 = vst.msk [vmem:[%s260] sm:$0xff] %vm956, %v2444
      %2461 = vst.msk [vmem:[%s260 + $0x8] sm:$0xff] %vm956, %v2445
      %2462 = vst.msk [vmem:[%s260 + $0x10] sm:$0xff] %vm956, %v2446
      %2463 = vst.msk [vmem:[%s260 + $0x18] sm:$0xff] %vm956, %v2447
      %2464 = vst.msk [vmem:[%s260 + $0x20] sm:$0xff] %vm956, %v2448
      %2465 = vst.msk [vmem:[%s260 + $0x28] sm:$0xff] %vm956, %v2449
      %2466 = vst.msk [vmem:[%s260 + $0x30] sm:$0xff] %vm956, %v2450
      %2467 = vst.msk [vmem:[%s260 + $0x38] sm:$0xff] %vm956, %v2451
      %2468 = vst.msk [vmem:[%s260 + $0x40] sm:$0xff] %vm956, %v2452
      %2469 = vst.msk [vmem:[%s260 + $0x48] sm:$0xff] %vm956, %v2453
      %2470 = vst.msk [vmem:[%s260 + $0x50] sm:$0xff] %vm956, %v2454
      %2471 = vst.msk [vmem:[%s260 + $0x58] sm:$0xff] %vm956, %v2455
      %2472 = vst.msk [vmem:[%s260 + $0x60] sm:$0xff] %vm956, %v2456
      %2473 = vst.msk [vmem:[%s260 + $0x68] sm:$0xff] %vm956, %v2457
      %2474 = vst.msk [vmem:[%s260 + $0x70] sm:$0xff] %vm956, %v2458
      %2475 = vst.msk [vmem:[%s260 + $0x78] sm:$0xff] %vm956, %v2459
      %p2476 = scmp.lt.s32.totalorder %s20, 1
      %s2477 = scalar_select %p2476, %s20, 1
      %p2478 = scmp.lt.s32.totalorder %s21, 1
      %s2479 = scalar_select %p2478, %s21, 1
      %s2480 = smul.addr %s2479, 16
      %s2481 = smul.addr %s2477, 32
      %s2482 = sadd.s32 %s2480, %s2481
      %s2483 = smul.addr %s2482, 8
      %s2484 = scalar_lea.vmem %s5, %s2483
      // Predicated region
      $region41: #{tpu_custom_call.1} parent=39 // pred_check
        %p2485 = pneg %p160
      $region42: #{tpu_custom_call.1} parent=39 // pred_check_branch
        %2487 = sbr.rel (%p2485) target = $region44
      $region43: #{tpu_custom_call.1} parent=39 // pred_region
        _
      $region44: #{tpu_custom_call.1} parent=39 // pred_fallthru
        _
    $region40: #{tpu_custom_call.1} parent=5 // pred_fallthru
      _
    %p2488 = scmp.le.s32.totalorder 2, %s11
    // Predicated region
    $region45: #{tpu_custom_call.1} parent=5 // pred_check
      %p2489 = pneg %p2488
    $region46: #{tpu_custom_call.1} parent=5 // pred_check_branch
      %2491 = sbr.rel (%p2489) target = $region48
    $region47: #{tpu_custom_call.1} parent=5 // pred_region
      %s2492 = ssub.s32 %s11, 2
      // Predicated region
      $region49: #{tpu_custom_call.1} parent=47 // pred_check
        %p2493 = pneg %p166
      $region50: #{tpu_custom_call.1} parent=47 // pred_check_branch
        %2495 = sbr.rel (%p2493) target = $region52
      $region51: #{tpu_custom_call.1} parent=47 // pred_region
        %p2496 = scmp.lt.s32.totalorder %s22, 1
        %s2497 = scalar_select %p2496, %s22, 1
        %p2498 = scmp.lt.s32.totalorder %s23, 1
        %s2499 = scalar_select %p2498, %s23, 1
        %s2500 = smul.addr %s2499, 16
        %s2501 = smul.addr %s2497, 32
        %s2502 = sadd.s32 %s2500, %s2501
        %s2503 = smul.addr %s2502, 8
        %s2504 = scalar_lea.vmem %s5, %s2503
      $region52: #{tpu_custom_call.1} parent=47 // pred_fallthru
        _
    $region48: #{tpu_custom_call.1} parent=5 // pred_fallthru
      _
  $region6: #{tpu_custom_call.1} parent=0 // loop_footer
    %s15 = sadd.s32 1, %s11
  $region7: #{tpu_custom_call.1} parent=0 // loop_footer_branch
    %10 = sbr.rel target = $region3
  $region8: #{tpu_custom_call.1} parent=0 // loop_exit
    _

</llo_original>
